<compile_context>
chip_gen: v5e
topology: v5e:2x2
jax: 0.10.0
libtpu: 0.0.40
codegen_flags: <defaults>
</compile_context>

<pallas_src>
import functools
import math

import jax
import jax.numpy as jnp
from jax.experimental import pallas as pl
from jax.experimental.pallas import tpu as pltpu


LANE = 128                      # pad channel dims to lane width -> unmasked vst
TILE_M = 1024                   # row tile of A (output rows)
TILE_K = 1024                   # contraction tile (cols of A / rows of XW)
VMEM_LIMIT = 40 * 1024 * 1024   # below v7x's 64 MiB physical; plenty on v5e/v6e
# Resident-XW path is used only if its (double-buffered) footprint stays small.
XW_RESIDENT_BYTES_MAX = 12 * 1024 * 1024


def _round_up(x, m):
    return (x + m - 1) // m * m


# ----------------------------- Pallas kernels -----------------------------

def xw_scale_kernel(x_ref, w_ref, d_ref, o_ref):
    """Per row tile: o = bf16( d^{-1/2} * (X @ W) ).  Not the hot path."""
    x = x_ref[...].astype(jnp.float32)           # x may be f32 (layer 1) or bf16 (h)
    xw = jnp.dot(x, w_ref[...], preferred_element_type=jnp.float32)
    o_ref[...] = (xw * d_ref[...]).astype(o_ref.dtype)


def aggregate_kernel(a_ref, xw_ref, d_ref, b_ref, o_ref, acc_ref, *,
                     apply_relu, xw_resident, tk):
    """Tiled A01 @ XW_scaled accumulation; finalize with row scale + bias (+ReLU)."""
    k = pl.program_id(1)

    @pl.when(k == 0)
    def _():
        acc_ref[...] = jnp.zeros_like(acc_ref)

    # A01 streamed as int8 (exact 0/1, minimal HBM bytes for the dominant
    # operand); upcast to bf16 so the MXU takes its fast single-pass bf16 path.
    a = a_ref[...].astype(jnp.bfloat16)
    if xw_resident:
        start = pl.multiple_of(k * tk, tk)
        xw = xw_ref[pl.ds(start, tk), :]          # full XW lives in VMEM
    else:
        xw = xw_ref[...]                          # per-k streamed block
    acc_ref[...] += jnp.dot(a, xw, preferred_element_type=jnp.float32)

    @pl.when(k == pl.num_programs(1) - 1)
    def _():
        out = acc_ref[...] * d_ref[...] + b_ref[...]
        if apply_relu:
            out = jnp.maximum(out, 0.0)
        o_ref[...] = out.astype(o_ref.dtype)


# ----------------------------- Layer wrapper -----------------------------

def gcn_layer(a01, d_inv_sqrt, x_p, w, b, *, apply_relu, out_dtype):
    """One GCN layer on padded inputs: diag(d) @ A01 @ diag(d) @ X @ W + b."""
    n_pad, f_in_pad = x_p.shape
    f_in, f_out = w.shape
    f_out_pad = _round_up(f_out, LANE)

    w_p = jnp.zeros((f_in_pad, f_out_pad), jnp.float32).at[:f_in, :f_out].set(w)
    b_p = jnp.zeros((1, f_out_pad), jnp.float32).at[0, :f_out].set(b)

    tm, tk = TILE_M, TILE_K
    assert n_pad % tm == 0 and n_pad % tk == 0

    # Stage 1 (tiny): XW_scaled = diag(d^{-1/2}) @ (X @ W), row-tiled, bf16 out.
    xw = pl.pallas_call(
        xw_scale_kernel,
        out_shape=jax.ShapeDtypeStruct((n_pad, f_out_pad), jnp.bfloat16),
        grid_spec=pltpu.PrefetchScalarGridSpec(
            num_scalar_prefetch=0,
            grid=(n_pad // tm,),
            in_specs=[
                pl.BlockSpec((tm, f_in_pad), lambda i: (i, 0)),
                pl.BlockSpec((f_in_pad, f_out_pad), lambda i: (0, 0)),
                pl.BlockSpec((tm, 1), lambda i: (i, 0)),
            ],
            out_specs=pl.BlockSpec((tm, f_out_pad), lambda i: (i, 0)),
        ),
        compiler_params=pltpu.CompilerParams(
            dimension_semantics=("parallel",),
            vmem_limit_bytes=VMEM_LIMIT),
    )(x_p, w_p, d_inv_sqrt)

    # Stage 2 (hot): out = diag(d^{-1/2}) @ (A01 @ XW_scaled) + b.
    # If XW fits on-chip, keep it fully VMEM-resident (constant block index ->
    # one DMA, never re-streamed per row tile); else stream it per k block.
    # Note: default double-buffering is kept (constant index still copies once);
    # footprint is accounted for with the 2x factor below.
    xw_resident = (2 * n_pad * f_out_pad * 2) <= XW_RESIDENT_BYTES_MAX
    if xw_resident:
        xw_spec = pl.BlockSpec((n_pad, f_out_pad), lambda i, k: (0, 0))
    else:
        xw_spec = pl.BlockSpec((tk, f_out_pad), lambda i, k: (k, 0))

    kernel = functools.partial(aggregate_kernel, apply_relu=apply_relu,
                               xw_resident=xw_resident, tk=tk)
    out = pl.pallas_call(
        kernel,
        out_shape=jax.ShapeDtypeStruct((n_pad, f_out_pad), out_dtype),
        grid_spec=pltpu.PrefetchScalarGridSpec(
            num_scalar_prefetch=0,
            grid=(n_pad // tm, n_pad // tk),
            in_specs=[
                pl.BlockSpec((tm, tk), lambda i, k: (i, k)),         # A01 (int8)
                xw_spec,                                             # XW_scaled (bf16)
                pl.BlockSpec((tm, 1), lambda i, k: (i, 0)),          # d^{-1/2} rows
                pl.BlockSpec((1, f_out_pad), lambda i, k: (0, 0)),   # bias
            ],
            out_specs=pl.BlockSpec((tm, f_out_pad), lambda i, k: (i, 0)),
            scratch_shapes=[pltpu.VMEM((tm, f_out_pad), jnp.float32)],
        ),
        compiler_params=pltpu.CompilerParams(
            dimension_semantics=("parallel", "arbitrary"),
            vmem_limit_bytes=VMEM_LIMIT),
    )(a01, xw, d_inv_sqrt, b_p)
    return out


# ----------------------------- Glue (plain JAX) -----------------------------

def build_graph(edge_index, num_nodes, n_pad):
    """Dense 0/1 (A+I) adjacency built directly in int8 + d^{-1/2} vector (f32)."""
    src = edge_index[0]
    dst = edge_index[1]
    a = jnp.zeros((n_pad, n_pad), jnp.int8)
    # message passing aggregates source features into target rows: A[dst, src] = 1
    a = a.at[dst, src].set(jnp.int8(1))
    idx = jnp.arange(num_nodes)
    a = a.at[idx, idx].set(jnp.int8(1))           # self loops for real nodes only
    deg = jnp.sum(a, axis=1, dtype=jnp.int32).astype(jnp.float32)
    d_inv_sqrt = jnp.where(deg > 0.0, jax.lax.rsqrt(deg), 0.0)
    # TODO(synk): duplicate edges are deduplicated (.set); PyG's gcn_norm
    # scatter-adds, so multigraphs / pre-existing self loops differ there.
    # TODO(synk): for very large/sparse graphs (esp. v5e) a CSR/neighbor-list
    # aggregation with scalar-prefetched offsets would replace this dense path.
    return a, d_inv_sqrt.reshape(n_pad, 1).astype(jnp.float32)


class TextGNNParams:
    """Deterministic init matching GCNConv(in, hid) + GCNConv(hid, out)."""

    def __init__(self, key, in_channels, hidden_channels, out_channels):
        k1, k2 = jax.random.split(key, 2)

        def glorot(k, fan_in, fan_out):
            limit = jnp.sqrt(6.0 / (fan_in + fan_out))
            return jax.random.uniform(
                k, (fan_in, fan_out), jnp.float32, -limit, limit)

        self.in_channels = in_channels
        self.hidden_channels = hidden_channels
        self.out_channels = out_channels
        self.w1 = glorot(k1, in_channels, hidden_channels)
        self.b1 = jnp.zeros((hidden_channels,), jnp.float32)
        self.w2 = glorot(k2, hidden_channels, out_channels)
        self.b2 = jnp.zeros((out_channels,), jnp.float32)


def text_gnn_forward(params, x, edge_index):
    n, f_in = x.shape
    # Single round-up to lcm so independent tile retuning can't break the asserts.
    n_pad = _round_up(n, math.lcm(TILE_M, TILE_K))
    a01, d_inv_sqrt = build_graph(edge_index, n, n_pad)

    f_in_pad = _round_up(f_in, LANE)
    x_p = jnp.zeros((n_pad, f_in_pad), jnp.float32).at[:n, :f_in].set(x)

    # conv1 + ReLU (fused in kernel); activation h emitted in bf16 to halve its
    # HBM write + re-read in layer 2 (accumulation stays f32).
    h = gcn_layer(a01, d_inv_sqrt, x_p, params.w1, params.b1,
                  apply_relu=True, out_dtype=jnp.bfloat16)
    # F.dropout(training=False) is the identity at inference time.
    # TODO(synk): training-mode dropout (pltpu PRNG mask + 1/(1-p) scale) not implemented.
    # conv2
    out = gcn_layer(a01, d_inv_sqrt, h, params.w2, params.b2,
                    apply_relu=False, out_dtype=jnp.float32)
    return out[:n, :params.out_channels]


def reference_forward(params, x, edge_index):
    """Plain-JAX dense f32 reference for validation."""
    n = x.shape[0]
    src, dst = edge_index[0], edge_index[1]
    a = jnp.zeros((n, n), jnp.float32).at[dst, src].set(1.0)
    a = a.at[jnp.arange(n), jnp.arange(n)].set(1.0)
    deg = jnp.sum(a, axis=1)
    dis = jnp.where(deg > 0, 1.0 / jnp.sqrt(deg), 0.0)
    a_hat = a * dis[:, None] * dis[None, :]
    h = jnp.maximum(a_hat @ (x @ params.w1) + params.b1, 0.0)
    return a_hat @ (h @ params.w2) + params.b2


# ----------------------------- Main -----------------------------

if __name__ == "__main__":
    key = jax.random.PRNGKey(0)
    k_x, k_e, k_p = jax.random.split(key, 3)

    num_nodes = 8
    in_channels = 16
    hidden_channels = 32
    out_channels = 8
    num_edges = 24

    x = jax.random.normal(k_x, (num_nodes, in_channels), jnp.float32)
    edge_index = jax.random.randint(k_e, (2, num_edges), 0, num_nodes, jnp.int32)

    params = TextGNNParams(k_p, in_channels, hidden_channels, out_channels)

    out = text_gnn_forward(params, x, edge_index)
    out = jax.block_until_ready(out)

    assert out.shape == (num_nodes, out_channels), out.shape
    assert out.dtype == jnp.float32, out.dtype

    ref = jax.block_until_ready(reference_forward(params, x, edge_index))
    # bf16 activations (XW_scaled, h) introduce small drift vs the f32 reference.
    assert jnp.allclose(out, ref, rtol=2e-2, atol=2e-2), float(
        jnp.max(jnp.abs(out - ref)))

    print("KERNEL_OK")
</pallas_src>

<mosaic_0001>
module attributes {stable_mosaic.version = 11 : i64} {
  func.func @xw_scale_kernel(%arg0: i32, %arg1: memref<1024x128xf32, #tpu.memory_space<vmem>>, %arg2: memref<128x128xf32, #tpu.memory_space<vmem>>, %arg3: memref<1024x1xf32, #tpu.memory_space<vmem>>, %arg4: memref<1024x128xbf16, #tpu.memory_space<vmem>>) attributes {dimension_semantics = [#tpu.dimension_semantics<parallel>], iteration_bounds = array<i64: 1>, scalar_prefetch = 0 : i64, scratch_operands = 0 : i64, tpu.core_type = #tpu.core_type<tc>, window_params = [{transform_indices = @transform_0, window_bounds = array<i64: 1024, 128>}, {pipeline_mode = #tpu.pipeline_mode<synchronous>, transform_indices = @transform_1, window_bounds = array<i64: 128, 128>}, {transform_indices = @transform_2, window_bounds = array<i64: 1024, 1>}, {transform_indices = @transform_3, window_bounds = array<i64: 1024, 128>}]} {
    %c0 = arith.constant 0 : index
    %c0_0 = arith.constant 0 : index
    %0 = vector.load %arg1[%c0, %c0_0] : memref<1024x128xf32, #tpu.memory_space<vmem>>, vector<1024x128xf32>
    %c0_1 = arith.constant 0 : index
    %c0_2 = arith.constant 0 : index
    %1 = vector.load %arg2[%c0_1, %c0_2] : memref<128x128xf32, #tpu.memory_space<vmem>>, vector<128x128xf32>
    %cst = arith.constant dense<0.000000e+00> : vector<1024x128xf32>
    %2 = tpu.matmul %0, %1, %cst {dimension_numbers = #tpu.dot_dimension_numbers<[1], [0], [0], [1], [0, 0, 1, 1], [], []>} : vector<1024x128xf32>, vector<128x128xf32>, vector<1024x128xf32> -> vector<1024x128xf32>
    %c0_3 = arith.constant 0 : index
    %c0_4 = arith.constant 0 : index
    %3 = vector.load %arg3[%c0_3, %c0_4] : memref<1024x1xf32, #tpu.memory_space<vmem>>, vector<1024x1xf32>
    %4 = vector.broadcast %3 : vector<1024x1xf32> to vector<1024x128xf32>
    %5 = arith.mulf %2, %4 : vector<1024x128xf32>
    %6 = arith.truncf %5 : vector<1024x128xf32> to vector<1024x128xbf16>
    %c0_5 = arith.constant 0 : index
    %c0_6 = arith.constant 0 : index
    %7 = vector.load %arg4[%c0_5, %c0_6] : memref<1024x128xbf16, #tpu.memory_space<vmem>>, vector<1024x128xbf16>
    tpu.vector_store %arg4[%c0_5, %c0_6], %6 {strides = array<i32>} : memref<1024x128xbf16, #tpu.memory_space<vmem>>, vector<1024x128xbf16>,
    return
  }
  func.func @transform_0(%arg0: i32) -> (i32, i32) {
    %c0_i32 = arith.constant 0 : i32
    %c0_i32_0 = arith.constant 0 : i32
    return %arg0, %c0_i32 : i32, i32
  }
  func.func @transform_1(%arg0: i32) -> (i32, i32) {
    %c0_i32 = arith.constant 0 : i32
    %c0_i32_0 = arith.constant 0 : i32
    %c0_i32_1 = arith.constant 0 : i32
    return %c0_i32, %c0_i32_0 : i32, i32
  }
  func.func @transform_2(%arg0: i32) -> (i32, i32) {
    %c0_i32 = arith.constant 0 : i32
    %c0_i32_0 = arith.constant 0 : i32
    return %arg0, %c0_i32 : i32, i32
  }
  func.func @transform_3(%arg0: i32) -> (i32, i32) {
    %c0_i32 = arith.constant 0 : i32
    %c0_i32_0 = arith.constant 0 : i32
    return %arg0, %c0_i32 : i32, i32
  }
}

</mosaic_0001>

<llo_original>
// kernel: tpu_custom_call.1
$region0: #{tpu_custom_call.1}
  #allocation0 [shape = 'u32[]', space=smem, size = 0x4, offset = 0x4, fixed_abs, tag = 'smem constant byte address 0x4 - core index']
  #allocation1 [shape = 'u32[72,128]{1,0:T(1,128)}', space=vmem, size = 0x9000, scoped, tag = 'internal scratch']
  %s0 = inlined_call_operand.vmem [shape: f32[1024,128], index: 0, kind: input, shape index: {}]
  %s1 = inlined_call_operand.hbm [shape: f32[128,128], index: 1, kind: input, shape index: {}]
  %s2 = inlined_call_operand.vmem [shape: f32[1024,1], index: 2, kind: input, shape index: {}]
  %s3 = inlined_call_operand.hbm [shape: bf16[1024,128], index: 3, kind: output, shape index: {}]
  %s4 = sld [smem:[#allocation0]]
  $region26: #{tpu_custom_call.1} parent=0
    _
  %s6 = ssub.s32 1, %s4
  %s7 = scalar_select 0, %s6, %s4
  $region1: #{tpu_custom_call.1} parent=0
    #allocation2 [shape = 'u8[65536]{0}', space=vmem, size = 0x10000, scoped, tag = 'input window, operand 1, single buffered']
    #allocation3 [shape = 's32[1]{0}', space=sflag, size = 0x4, scoped, tag = 'scoped memory for tpu_custom_call.1']
    #allocation4 [shape = 's32[1]{0}', space=sflag, size = 0x4, scoped, tag = 'scoped memory for tpu_custom_call.1']
    #allocation5 [shape = 'u8[262144]{0}', space=vmem, size = 0x40000, scoped, tag = 'output window, operand 0, single buffered']
    %8 = vsyncpa [#allocation3], 0
    %9 = vsyncpa [#allocation4], 0
    // Predicated region
    $region2: #{tpu_custom_call.1} parent=1 // pred_check
      _
    $region3: #{tpu_custom_call.1} parent=1 // pred_check_branch
      %11 = sbr.rel (0) target = $region5
    $region4: #{tpu_custom_call.1} parent=1 // pred_region
      _
    $region5: #{tpu_custom_call.1} parent=1 // pred_fallthru
      _
    // Predicated region
    $region6: #{tpu_custom_call.1} parent=1 // pred_check
      _
    $region7: #{tpu_custom_call.1} parent=1 // pred_check_branch
      %13 = sbr.rel (0) target = $region9
    $region8: #{tpu_custom_call.1} parent=1 // pred_region
      %15 = vsyncadd [#allocation3], 0
      %s16 = sshll.u32 %s1, 4
      %s17 = int_to_ptr.hbm [resolvable:$true] %s16
      %s18 = sshll.u32 [#allocation2], 4
      %s19 = int_to_ptr.vmem [resolvable:$true] %s18
      %24 = dma.hbm_to_vmem [thread:$0]  %s17, 2048, %s19, [#allocation3], 128, 128, 8
    $region9: #{tpu_custom_call.1} parent=1 // pred_fallthru
      _
    // Predicated region
    $region10: #{tpu_custom_call.1} parent=1 // pred_check
      _
    $region11: #{tpu_custom_call.1} parent=1 // pred_check_branch
      %26 = sbr.rel (0) target = $region13
    $region12: #{tpu_custom_call.1} parent=1 // pred_region
      _
    $region13: #{tpu_custom_call.1} parent=1 // pred_fallthru
      _
    // Predicated region
    $region14: #{tpu_custom_call.1} parent=1 // pred_check
      _
    $region15: #{tpu_custom_call.1} parent=1 // pred_check_branch
      %28 = sbr.rel (0) target = $region17
    $region16: #{tpu_custom_call.1} parent=1 // pred_region
      %30 = dma.done [#allocation3], 2048
    $region17: #{tpu_custom_call.1} parent=1 // pred_fallthru
      _
    %v31 = vld [vmem:[%s0] sm:$0xff]
    %v32 = vld [vmem:[%s0 + $0x8] sm:$0xff]
    %v33 = vld [vmem:[%s0 + $0x10] sm:$0xff]
    %v34 = vld [vmem:[%s0 + $0x18] sm:$0xff]
    %v35 = vld [vmem:[%s0 + $0x20] sm:$0xff]
    %v36 = vld [vmem:[%s0 + $0x28] sm:$0xff]
    %v37 = vld [vmem:[%s0 + $0x30] sm:$0xff]
    %v38 = vld [vmem:[%s0 + $0x38] sm:$0xff]
    %v39 = vld [vmem:[%s0 + $0x40] sm:$0xff]
    %v40 = vld [vmem:[%s0 + $0x48] sm:$0xff]
    %v41 = vld [vmem:[%s0 + $0x50] sm:$0xff]
    %v42 = vld [vmem:[%s0 + $0x58] sm:$0xff]
    %v43 = vld [vmem:[%s0 + $0x60] sm:$0xff]
    %v44 = vld [vmem:[%s0 + $0x68] sm:$0xff]
    %v45 = vld [vmem:[%s0 + $0x70] sm:$0xff]
    %v46 = vld [vmem:[%s0 + $0x78] sm:$0xff]
    %v47 = vld [vmem:[%s0 + $0x80] sm:$0xff]
    %v48 = vld [vmem:[%s0 + $0x88] sm:$0xff]
    %v49 = vld [vmem:[%s0 + $0x90] sm:$0xff]
    %v50 = vld [vmem:[%s0 + $0x98] sm:$0xff]
    %v51 = vld [vmem:[%s0 + $0xa0] sm:$0xff]
    %v52 = vld [vmem:[%s0 + $0xa8] sm:$0xff]
    %v53 = vld [vmem:[%s0 + $0xb0] sm:$0xff]
    %v54 = vld [vmem:[%s0 + $0xb8] sm:$0xff]
    %v55 = vld [vmem:[%s0 + $0xc0] sm:$0xff]
    %v56 = vld [vmem:[%s0 + $0xc8] sm:$0xff]
    %v57 = vld [vmem:[%s0 + $0xd0] sm:$0xff]
    %v58 = vld [vmem:[%s0 + $0xd8] sm:$0xff]
    %v59 = vld [vmem:[%s0 + $0xe0] sm:$0xff]
    %v60 = vld [vmem:[%s0 + $0xe8] sm:$0xff]
    %v61 = vld [vmem:[%s0 + $0xf0] sm:$0xff]
    %v62 = vld [vmem:[%s0 + $0xf8] sm:$0xff]
    %v63 = vld [vmem:[%s0 + $0x100] sm:$0xff]
    %v64 = vld [vmem:[%s0 + $0x108] sm:$0xff]
    %v65 = vld [vmem:[%s0 + $0x110] sm:$0xff]
    %v66 = vld [vmem:[%s0 + $0x118] sm:$0xff]
    %v67 = vld [vmem:[%s0 + $0x120] sm:$0xff]
    %v68 = vld [vmem:[%s0 + $0x128] sm:$0xff]
    %v69 = vld [vmem:[%s0 + $0x130] sm:$0xff]
    %v70 = vld [vmem:[%s0 + $0x138] sm:$0xff]
    %v71 = vld [vmem:[%s0 + $0x140] sm:$0xff]
    %v72 = vld [vmem:[%s0 + $0x148] sm:$0xff]
    %v73 = vld [vmem:[%s0 + $0x150] sm:$0xff]
    %v74 = vld [vmem:[%s0 + $0x158] sm:$0xff]
    %v75 = vld [vmem:[%s0 + $0x160] sm:$0xff]
    %v76 = vld [vmem:[%s0 + $0x168] sm:$0xff]
    %v77 = vld [vmem:[%s0 + $0x170] sm:$0xff]
    %v78 = vld [vmem:[%s0 + $0x178] sm:$0xff]
    %v79 = vld [vmem:[%s0 + $0x180] sm:$0xff]
    %v80 = vld [vmem:[%s0 + $0x188] sm:$0xff]
    %v81 = vld [vmem:[%s0 + $0x190] sm:$0xff]
    %v82 = vld [vmem:[%s0 + $0x198] sm:$0xff]
    %v83 = vld [vmem:[%s0 + $0x1a0] sm:$0xff]
    %v84 = vld [vmem:[%s0 + $0x1a8] sm:$0xff]
    %v85 = vld [vmem:[%s0 + $0x1b0] sm:$0xff]
    %v86 = vld [vmem:[%s0 + $0x1b8] sm:$0xff]
    %v87 = vld [vmem:[%s0 + $0x1c0] sm:$0xff]
    %v88 = vld [vmem:[%s0 + $0x1c8] sm:$0xff]
    %v89 = vld [vmem:[%s0 + $0x1d0] sm:$0xff]
    %v90 = vld [vmem:[%s0 + $0x1d8] sm:$0xff]
    %v91 = vld [vmem:[%s0 + $0x1e0] sm:$0xff]
    %v92 = vld [vmem:[%s0 + $0x1e8] sm:$0xff]
    %v93 = vld [vmem:[%s0 + $0x1f0] sm:$0xff]
    %v94 = vld [vmem:[%s0 + $0x1f8] sm:$0xff]
    %v95 = vld [vmem:[%s0 + $0x200] sm:$0xff]
    %v96 = vld [vmem:[%s0 + $0x208] sm:$0xff]
    %v97 = vld [vmem:[%s0 + $0x210] sm:$0xff]
    %v98 = vld [vmem:[%s0 + $0x218] sm:$0xff]
    %v99 = vld [vmem:[%s0 + $0x220] sm:$0xff]
    %v100 = vld [vmem:[%s0 + $0x228] sm:$0xff]
    %v101 = vld [vmem:[%s0 + $0x230] sm:$0xff]
    %v102 = vld [vmem:[%s0 + $0x238] sm:$0xff]
    %v103 = vld [vmem:[%s0 + $0x240] sm:$0xff]
    %v104 = vld [vmem:[%s0 + $0x248] sm:$0xff]
    %v105 = vld [vmem:[%s0 + $0x250] sm:$0xff]
    %v106 = vld [vmem:[%s0 + $0x258] sm:$0xff]
    %v107 = vld [vmem:[%s0 + $0x260] sm:$0xff]
    %v108 = vld [vmem:[%s0 + $0x268] sm:$0xff]
    %v109 = vld [vmem:[%s0 + $0x270] sm:$0xff]
    %v110 = vld [vmem:[%s0 + $0x278] sm:$0xff]
    %v111 = vld [vmem:[%s0 + $0x280] sm:$0xff]
    %v112 = vld [vmem:[%s0 + $0x288] sm:$0xff]
    %v113 = vld [vmem:[%s0 + $0x290] sm:$0xff]
    %v114 = vld [vmem:[%s0 + $0x298] sm:$0xff]
    %v115 = vld [vmem:[%s0 + $0x2a0] sm:$0xff]
    %v116 = vld [vmem:[%s0 + $0x2a8] sm:$0xff]
    %v117 = vld [vmem:[%s0 + $0x2b0] sm:$0xff]
    %v118 = vld [vmem:[%s0 + $0x2b8] sm:$0xff]
    %v119 = vld [vmem:[%s0 + $0x2c0] sm:$0xff]
    %v120 = vld [vmem:[%s0 + $0x2c8] sm:$0xff]
    %v121 = vld [vmem:[%s0 + $0x2d0] sm:$0xff]
    %v122 = vld [vmem:[%s0 + $0x2d8] sm:$0xff]
    %v123 = vld [vmem:[%s0 + $0x2e0] sm:$0xff]
    %v124 = vld [vmem:[%s0 + $0x2e8] sm:$0xff]
    %v125 = vld [vmem:[%s0 + $0x2f0] sm:$0xff]
    %v126 = vld [vmem:[%s0 + $0x2f8] sm:$0xff]
    %v127 = vld [vmem:[%s0 + $0x300] sm:$0xff]
    %v128 = vld [vmem:[%s0 + $0x308] sm:$0xff]
    %v129 = vld [vmem:[%s0 + $0x310] sm:$0xff]
    %v130 = vld [vmem:[%s0 + $0x318] sm:$0xff]
    %v131 = vld [vmem:[%s0 + $0x320] sm:$0xff]
    %v132 = vld [vmem:[%s0 + $0x328] sm:$0xff]
    %v133 = vld [vmem:[%s0 + $0x330] sm:$0xff]
    %v134 = vld [vmem:[%s0 + $0x338] sm:$0xff]
    %v135 = vld [vmem:[%s0 + $0x340] sm:$0xff]
    %v136 = vld [vmem:[%s0 + $0x348] sm:$0xff]
    %v137 = vld [vmem:[%s0 + $0x350] sm:$0xff]
    %v138 = vld [vmem:[%s0 + $0x358] sm:$0xff]
    %v139 = vld [vmem:[%s0 + $0x360] sm:$0xff]
    %v140 = vld [vmem:[%s0 + $0x368] sm:$0xff]
    %v141 = vld [vmem:[%s0 + $0x370] sm:$0xff]
    %v142 = vld [vmem:[%s0 + $0x378] sm:$0xff]
    %v143 = vld [vmem:[%s0 + $0x380] sm:$0xff]
    %v144 = vld [vmem:[%s0 + $0x388] sm:$0xff]
    %v145 = vld [vmem:[%s0 + $0x390] sm:$0xff]
    %v146 = vld [vmem:[%s0 + $0x398] sm:$0xff]
    %v147 = vld [vmem:[%s0 + $0x3a0] sm:$0xff]
    %v148 = vld [vmem:[%s0 + $0x3a8] sm:$0xff]
    %v149 = vld [vmem:[%s0 + $0x3b0] sm:$0xff]
    %v150 = vld [vmem:[%s0 + $0x3b8] sm:$0xff]
    %v151 = vld [vmem:[%s0 + $0x3c0] sm:$0xff]
    %v152 = vld [vmem:[%s0 + $0x3c8] sm:$0xff]
    %v153 = vld [vmem:[%s0 + $0x3d0] sm:$0xff]
    %v154 = vld [vmem:[%s0 + $0x3d8] sm:$0xff]
    %v155 = vld [vmem:[%s0 + $0x3e0] sm:$0xff]
    %v156 = vld [vmem:[%s0 + $0x3e8] sm:$0xff]
    %v157 = vld [vmem:[%s0 + $0x3f0] sm:$0xff]
    %v158 = vld [vmem:[%s0 + $0x3f8] sm:$0xff]
    %v159 = vld [vmem:[#allocation2] sm:$0xff]
    %v160 = vld [vmem:[#allocation2 + $0x8] sm:$0xff]
    %v161 = vld [vmem:[#allocation2 + $0x10] sm:$0xff]
    %v162 = vld [vmem:[#allocation2 + $0x18] sm:$0xff]
    %v163 = vld [vmem:[#allocation2 + $0x20] sm:$0xff]
    %v164 = vld [vmem:[#allocation2 + $0x28] sm:$0xff]
    %v165 = vld [vmem:[#allocation2 + $0x30] sm:$0xff]
    %v166 = vld [vmem:[#allocation2 + $0x38] sm:$0xff]
    %v167 = vld [vmem:[#allocation2 + $0x40] sm:$0xff]
    %v168 = vld [vmem:[#allocation2 + $0x48] sm:$0xff]
    %v169 = vld [vmem:[#allocation2 + $0x50] sm:$0xff]
    %v170 = vld [vmem:[#allocation2 + $0x58] sm:$0xff]
    %v171 = vld [vmem:[#allocation2 + $0x60] sm:$0xff]
    %v172 = vld [vmem:[#allocation2 + $0x68] sm:$0xff]
    %v173 = vld [vmem:[#allocation2 + $0x70] sm:$0xff]
    %v174 = vld [vmem:[#allocation2 + $0x78] sm:$0xff]
    %175 = vmatpush.msra.mxu0 %v174
    %176 = vmatpush.msra.mxu0 %v173
    %177 = vmatpush.msra.mxu0 %v172
    %178 = vmatpush.msra.mxu0 %v171
    %179 = vmatpush.msra.mxu0 %v170
    %180 = vmatpush.msra.mxu0 %v169
    %181 = vmatpush.msra.mxu0 %v168
    %182 = vmatpush.msra.mxu0 %v167
    %183 = vmatpush.msra.mxu0 %v166
    %184 = vmatpush.msra.mxu0 %v165
    %185 = vmatpush.msra.mxu0 %v164
    %186 = vmatpush.msra.mxu0 %v163
    %187 = vmatpush.msra.mxu0 %v162
    %188 = vmatpush.msra.mxu0 %v161
    %189 = vmatpush.msra.mxu0 %v160
    %190 = vmatpush.msra.mxu0 %v159
    %191 = vmatmul.f32.gmra.mxu0 %v31
    %v192 = vpop.f32.mrf.mxu0
    %v193 = vadd.f32 0.0, %v192
    %194 = vmatmul.f32.gmra.mxu0 %v32
    %v195 = vpop.f32.mrf.mxu0
    %v196 = vadd.f32 0.0, %v195
    %197 = vmatmul.f32.gmra.mxu0 %v33
    %v198 = vpop.f32.mrf.mxu0
    %v199 = vadd.f32 0.0, %v198
    %200 = vmatmul.f32.gmra.mxu0 %v34
    %v201 = vpop.f32.mrf.mxu0
    %v202 = vadd.f32 0.0, %v201
    %203 = vmatmul.f32.gmra.mxu0 %v35
    %v204 = vpop.f32.mrf.mxu0
    %v205 = vadd.f32 0.0, %v204
    %206 = vmatmul.f32.gmra.mxu0 %v36
    %v207 = vpop.f32.mrf.mxu0
    %v208 = vadd.f32 0.0, %v207
    %209 = vmatmul.f32.gmra.mxu0 %v37
    %v210 = vpop.f32.mrf.mxu0
    %v211 = vadd.f32 0.0, %v210
    %212 = vmatmul.f32.gmra.mxu0 %v38
    %v213 = vpop.f32.mrf.mxu0
    %v214 = vadd.f32 0.0, %v213
    %215 = vmatmul.f32.gmra.mxu0 %v39
    %v216 = vpop.f32.mrf.mxu0
    %v217 = vadd.f32 0.0, %v216
    %218 = vmatmul.f32.gmra.mxu0 %v40
    %v219 = vpop.f32.mrf.mxu0
    %v220 = vadd.f32 0.0, %v219
    %221 = vmatmul.f32.gmra.mxu0 %v41
    %v222 = vpop.f32.mrf.mxu0
    %v223 = vadd.f32 0.0, %v222
    %224 = vmatmul.f32.gmra.mxu0 %v42
    %v225 = vpop.f32.mrf.mxu0
    %v226 = vadd.f32 0.0, %v225
    %227 = vmatmul.f32.gmra.mxu0 %v43
    %v228 = vpop.f32.mrf.mxu0
    %v229 = vadd.f32 0.0, %v228
    %230 = vmatmul.f32.gmra.mxu0 %v44
    %v231 = vpop.f32.mrf.mxu0
    %v232 = vadd.f32 0.0, %v231
    %233 = vmatmul.f32.gmra.mxu0 %v45
    %v234 = vpop.f32.mrf.mxu0
    %v235 = vadd.f32 0.0, %v234
    %236 = vmatmul.f32.gmra.mxu0 %v46
    %v237 = vpop.f32.mrf.mxu0
    %v238 = vadd.f32 0.0, %v237
    %239 = vmatmul.f32.gmra.mxu0 %v47
    %v240 = vpop.f32.mrf.mxu0
    %v241 = vadd.f32 0.0, %v240
    %242 = vmatmul.f32.gmra.mxu0 %v48
    %v243 = vpop.f32.mrf.mxu0
    %v244 = vadd.f32 0.0, %v243
    %245 = vmatmul.f32.gmra.mxu0 %v49
    %v246 = vpop.f32.mrf.mxu0
    %v247 = vadd.f32 0.0, %v246
    %248 = vmatmul.f32.gmra.mxu0 %v50
    %v249 = vpop.f32.mrf.mxu0
    %v250 = vadd.f32 0.0, %v249
    %251 = vmatmul.f32.gmra.mxu0 %v51
    %v252 = vpop.f32.mrf.mxu0
    %v253 = vadd.f32 0.0, %v252
    %254 = vmatmul.f32.gmra.mxu0 %v52
    %v255 = vpop.f32.mrf.mxu0
    %v256 = vadd.f32 0.0, %v255
    %257 = vmatmul.f32.gmra.mxu0 %v53
    %v258 = vpop.f32.mrf.mxu0
    %v259 = vadd.f32 0.0, %v258
    %260 = vmatmul.f32.gmra.mxu0 %v54
    %v261 = vpop.f32.mrf.mxu0
    %v262 = vadd.f32 0.0, %v261
    %263 = vmatmul.f32.gmra.mxu0 %v55
    %v264 = vpop.f32.mrf.mxu0
    %v265 = vadd.f32 0.0, %v264
    %266 = vmatmul.f32.gmra.mxu0 %v56
    %v267 = vpop.f32.mrf.mxu0
    %v268 = vadd.f32 0.0, %v267
    %269 = vmatmul.f32.gmra.mxu0 %v57
    %v270 = vpop.f32.mrf.mxu0
    %v271 = vadd.f32 0.0, %v270
    %272 = vmatmul.f32.gmra.mxu0 %v58
    %v273 = vpop.f32.mrf.mxu0
    %v274 = vadd.f32 0.0, %v273
    %275 = vmatmul.f32.gmra.mxu0 %v59
    %v276 = vpop.f32.mrf.mxu0
    %v277 = vadd.f32 0.0, %v276
    %278 = vmatmul.f32.gmra.mxu0 %v60
    %v279 = vpop.f32.mrf.mxu0
    %v280 = vadd.f32 0.0, %v279
    %281 = vmatmul.f32.gmra.mxu0 %v61
    %v282 = vpop.f32.mrf.mxu0
    %v283 = vadd.f32 0.0, %v282
    %284 = vmatmul.f32.gmra.mxu0 %v62
    %v285 = vpop.f32.mrf.mxu0
    %v286 = vadd.f32 0.0, %v285
    %287 = vmatmul.f32.gmra.mxu0 %v63
    %v288 = vpop.f32.mrf.mxu0
    %v289 = vadd.f32 0.0, %v288
    %290 = vmatmul.f32.gmra.mxu0 %v64
    %v291 = vpop.f32.mrf.mxu0
    %v292 = vadd.f32 0.0, %v291
    %293 = vmatmul.f32.gmra.mxu0 %v65
    %v294 = vpop.f32.mrf.mxu0
    %v295 = vadd.f32 0.0, %v294
    %296 = vmatmul.f32.gmra.mxu0 %v66
    %v297 = vpop.f32.mrf.mxu0
    %v298 = vadd.f32 0.0, %v297
    %299 = vmatmul.f32.gmra.mxu0 %v67
    %v300 = vpop.f32.mrf.mxu0
    %v301 = vadd.f32 0.0, %v300
    %302 = vmatmul.f32.gmra.mxu0 %v68
    %v303 = vpop.f32.mrf.mxu0
    %v304 = vadd.f32 0.0, %v303
    %305 = vmatmul.f32.gmra.mxu0 %v69
    %v306 = vpop.f32.mrf.mxu0
    %v307 = vadd.f32 0.0, %v306
    %308 = vmatmul.f32.gmra.mxu0 %v70
    %v309 = vpop.f32.mrf.mxu0
    %v310 = vadd.f32 0.0, %v309
    %311 = vmatmul.f32.gmra.mxu0 %v71
    %v312 = vpop.f32.mrf.mxu0
    %v313 = vadd.f32 0.0, %v312
    %314 = vmatmul.f32.gmra.mxu0 %v72
    %v315 = vpop.f32.mrf.mxu0
    %v316 = vadd.f32 0.0, %v315
    %317 = vmatmul.f32.gmra.mxu0 %v73
    %v318 = vpop.f32.mrf.mxu0
    %v319 = vadd.f32 0.0, %v318
    %320 = vmatmul.f32.gmra.mxu0 %v74
    %v321 = vpop.f32.mrf.mxu0
    %v322 = vadd.f32 0.0, %v321
    %323 = vmatmul.f32.gmra.mxu0 %v75
    %v324 = vpop.f32.mrf.mxu0
    %v325 = vadd.f32 0.0, %v324
    %326 = vmatmul.f32.gmra.mxu0 %v76
    %v327 = vpop.f32.mrf.mxu0
    %v328 = vadd.f32 0.0, %v327
    %329 = vmatmul.f32.gmra.mxu0 %v77
    %v330 = vpop.f32.mrf.mxu0
    %v331 = vadd.f32 0.0, %v330
    %332 = vmatmul.f32.gmra.mxu0 %v78
    %v333 = vpop.f32.mrf.mxu0
    %v334 = vadd.f32 0.0, %v333
    %335 = vmatmul.f32.gmra.mxu0 %v79
    %v336 = vpop.f32.mrf.mxu0
    %v337 = vadd.f32 0.0, %v336
    %338 = vmatmul.f32.gmra.mxu0 %v80
    %v339 = vpop.f32.mrf.mxu0
    %v340 = vadd.f32 0.0, %v339
    %341 = vmatmul.f32.gmra.mxu0 %v81
    %v342 = vpop.f32.mrf.mxu0
    %v343 = vadd.f32 0.0, %v342
    %344 = vmatmul.f32.gmra.mxu0 %v82
    %v345 = vpop.f32.mrf.mxu0
    %v346 = vadd.f32 0.0, %v345
    %347 = vmatmul.f32.gmra.mxu0 %v83
    %v348 = vpop.f32.mrf.mxu0
    %v349 = vadd.f32 0.0, %v348
    %350 = vmatmul.f32.gmra.mxu0 %v84
    %v351 = vpop.f32.mrf.mxu0
    %v352 = vadd.f32 0.0, %v351
    %353 = vmatmul.f32.gmra.mxu0 %v85
    %v354 = vpop.f32.mrf.mxu0
    %v355 = vadd.f32 0.0, %v354
    %356 = vmatmul.f32.gmra.mxu0 %v86
    %v357 = vpop.f32.mrf.mxu0
    %v358 = vadd.f32 0.0, %v357
    %359 = vmatmul.f32.gmra.mxu0 %v87
    %v360 = vpop.f32.mrf.mxu0
    %v361 = vadd.f32 0.0, %v360
    %362 = vmatmul.f32.gmra.mxu0 %v88
    %v363 = vpop.f32.mrf.mxu0
    %v364 = vadd.f32 0.0, %v363
    %365 = vmatmul.f32.gmra.mxu0 %v89
    %v366 = vpop.f32.mrf.mxu0
    %v367 = vadd.f32 0.0, %v366
    %368 = vmatmul.f32.gmra.mxu0 %v90
    %v369 = vpop.f32.mrf.mxu0
    %v370 = vadd.f32 0.0, %v369
    %371 = vmatmul.f32.gmra.mxu0 %v91
    %v372 = vpop.f32.mrf.mxu0
    %v373 = vadd.f32 0.0, %v372
    %374 = vmatmul.f32.gmra.mxu0 %v92
    %v375 = vpop.f32.mrf.mxu0
    %v376 = vadd.f32 0.0, %v375
    %377 = vmatmul.f32.gmra.mxu0 %v93
    %v378 = vpop.f32.mrf.mxu0
    %v379 = vadd.f32 0.0, %v378
    %380 = vmatmul.f32.gmra.mxu0 %v94
    %v381 = vpop.f32.mrf.mxu0
    %v382 = vadd.f32 0.0, %v381
    %383 = vmatmul.f32.gmra.mxu0 %v95
    %v384 = vpop.f32.mrf.mxu0
    %v385 = vadd.f32 0.0, %v384
    %386 = vmatmul.f32.gmra.mxu0 %v96
    %v387 = vpop.f32.mrf.mxu0
    %v388 = vadd.f32 0.0, %v387
    %389 = vmatmul.f32.gmra.mxu0 %v97
    %v390 = vpop.f32.mrf.mxu0
    %v391 = vadd.f32 0.0, %v390
    %392 = vmatmul.f32.gmra.mxu0 %v98
    %v393 = vpop.f32.mrf.mxu0
    %v394 = vadd.f32 0.0, %v393
    %395 = vmatmul.f32.gmra.mxu0 %v99
    %v396 = vpop.f32.mrf.mxu0
    %v397 = vadd.f32 0.0, %v396
    %398 = vmatmul.f32.gmra.mxu0 %v100
    %v399 = vpop.f32.mrf.mxu0
    %v400 = vadd.f32 0.0, %v399
    %401 = vmatmul.f32.gmra.mxu0 %v101
    %v402 = vpop.f32.mrf.mxu0
    %v403 = vadd.f32 0.0, %v402
    %404 = vmatmul.f32.gmra.mxu0 %v102
    %v405 = vpop.f32.mrf.mxu0
    %v406 = vadd.f32 0.0, %v405
    %407 = vmatmul.f32.gmra.mxu0 %v103
    %v408 = vpop.f32.mrf.mxu0
    %v409 = vadd.f32 0.0, %v408
    %410 = vmatmul.f32.gmra.mxu0 %v104
    %v411 = vpop.f32.mrf.mxu0
    %v412 = vadd.f32 0.0, %v411
    %413 = vmatmul.f32.gmra.mxu0 %v105
    %v414 = vpop.f32.mrf.mxu0
    %v415 = vadd.f32 0.0, %v414
    %416 = vmatmul.f32.gmra.mxu0 %v106
    %v417 = vpop.f32.mrf.mxu0
    %v418 = vadd.f32 0.0, %v417
    %419 = vmatmul.f32.gmra.mxu0 %v107
    %v420 = vpop.f32.mrf.mxu0
    %v421 = vadd.f32 0.0, %v420
    %422 = vmatmul.f32.gmra.mxu0 %v108
    %v423 = vpop.f32.mrf.mxu0
    %v424 = vadd.f32 0.0, %v423
    %425 = vmatmul.f32.gmra.mxu0 %v109
    %v426 = vpop.f32.mrf.mxu0
    %v427 = vadd.f32 0.0, %v426
    %428 = vmatmul.f32.gmra.mxu0 %v110
    %v429 = vpop.f32.mrf.mxu0
    %v430 = vadd.f32 0.0, %v429
    %431 = vmatmul.f32.gmra.mxu0 %v111
    %v432 = vpop.f32.mrf.mxu0
    %v433 = vadd.f32 0.0, %v432
    %434 = vmatmul.f32.gmra.mxu0 %v112
    %v435 = vpop.f32.mrf.mxu0
    %v436 = vadd.f32 0.0, %v435
    %437 = vmatmul.f32.gmra.mxu0 %v113
    %v438 = vpop.f32.mrf.mxu0
    %v439 = vadd.f32 0.0, %v438
    %440 = vmatmul.f32.gmra.mxu0 %v114
    %v441 = vpop.f32.mrf.mxu0
    %v442 = vadd.f32 0.0, %v441
    %443 = vmatmul.f32.gmra.mxu0 %v115
    %v444 = vpop.f32.mrf.mxu0
    %v445 = vadd.f32 0.0, %v444
    %446 = vmatmul.f32.gmra.mxu0 %v116
    %v447 = vpop.f32.mrf.mxu0
    %v448 = vadd.f32 0.0, %v447
    %449 = vmatmul.f32.gmra.mxu0 %v117
    %v450 = vpop.f32.mrf.mxu0
    %v451 = vadd.f32 0.0, %v450
    %452 = vmatmul.f32.gmra.mxu0 %v118
    %v453 = vpop.f32.mrf.mxu0
    %v454 = vadd.f32 0.0, %v453
    %455 = vmatmul.f32.gmra.mxu0 %v119
    %v456 = vpop.f32.mrf.mxu0
    %v457 = vadd.f32 0.0, %v456
    %458 = vmatmul.f32.gmra.mxu0 %v120
    %v459 = vpop.f32.mrf.mxu0
    %v460 = vadd.f32 0.0, %v459
    %461 = vmatmul.f32.gmra.mxu0 %v121
    %v462 = vpop.f32.mrf.mxu0
    %v463 = vadd.f32 0.0, %v462
    %464 = vmatmul.f32.gmra.mxu0 %v122
    %v465 = vpop.f32.mrf.mxu0
    %v466 = vadd.f32 0.0, %v465
    %467 = vmatmul.f32.gmra.mxu0 %v123
    %v468 = vpop.f32.mrf.mxu0
    %v469 = vadd.f32 0.0, %v468
    %470 = vmatmul.f32.gmra.mxu0 %v124
    %v471 = vpop.f32.mrf.mxu0
    %v472 = vadd.f32 0.0, %v471
    %473 = vmatmul.f32.gmra.mxu0 %v125
    %v474 = vpop.f32.mrf.mxu0
    %v475 = vadd.f32 0.0, %v474
    %476 = vmatmul.f32.gmra.mxu0 %v126
    %v477 = vpop.f32.mrf.mxu0
    %v478 = vadd.f32 0.0, %v477
    %479 = vmatmul.f32.gmra.mxu0 %v127
    %v480 = vpop.f32.mrf.mxu0
    %v481 = vadd.f32 0.0, %v480
    %482 = vmatmul.f32.gmra.mxu0 %v128
    %v483 = vpop.f32.mrf.mxu0
    %v484 = vadd.f32 0.0, %v483
    %485 = vmatmul.f32.gmra.mxu0 %v129
    %v486 = vpop.f32.mrf.mxu0
    %v487 = vadd.f32 0.0, %v486
    %488 = vmatmul.f32.gmra.mxu0 %v130
    %v489 = vpop.f32.mrf.mxu0
    %v490 = vadd.f32 0.0, %v489
    %491 = vmatmul.f32.gmra.mxu0 %v131
    %v492 = vpop.f32.mrf.mxu0
    %v493 = vadd.f32 0.0, %v492
    %494 = vmatmul.f32.gmra.mxu0 %v132
    %v495 = vpop.f32.mrf.mxu0
    %v496 = vadd.f32 0.0, %v495
    %497 = vmatmul.f32.gmra.mxu0 %v133
    %v498 = vpop.f32.mrf.mxu0
    %v499 = vadd.f32 0.0, %v498
    %500 = vmatmul.f32.gmra.mxu0 %v134
    %v501 = vpop.f32.mrf.mxu0
    %v502 = vadd.f32 0.0, %v501
    %503 = vmatmul.f32.gmra.mxu0 %v135
    %v504 = vpop.f32.mrf.mxu0
    %v505 = vadd.f32 0.0, %v504
    %506 = vmatmul.f32.gmra.mxu0 %v136
    %v507 = vpop.f32.mrf.mxu0
    %v508 = vadd.f32 0.0, %v507
    %509 = vmatmul.f32.gmra.mxu0 %v137
    %v510 = vpop.f32.mrf.mxu0
    %v511 = vadd.f32 0.0, %v510
    %512 = vmatmul.f32.gmra.mxu0 %v138
    %v513 = vpop.f32.mrf.mxu0
    %v514 = vadd.f32 0.0, %v513
    %515 = vmatmul.f32.gmra.mxu0 %v139
    %v516 = vpop.f32.mrf.mxu0
    %v517 = vadd.f32 0.0, %v516
    %518 = vmatmul.f32.gmra.mxu0 %v140
    %v519 = vpop.f32.mrf.mxu0
    %v520 = vadd.f32 0.0, %v519
    %521 = vmatmul.f32.gmra.mxu0 %v141
    %v522 = vpop.f32.mrf.mxu0
    %v523 = vadd.f32 0.0, %v522
    %524 = vmatmul.f32.gmra.mxu0 %v142
    %v525 = vpop.f32.mrf.mxu0
    %v526 = vadd.f32 0.0, %v525
    %527 = vmatmul.f32.gmra.mxu0 %v143
    %v528 = vpop.f32.mrf.mxu0
    %v529 = vadd.f32 0.0, %v528
    %530 = vmatmul.f32.gmra.mxu0 %v144
    %v531 = vpop.f32.mrf.mxu0
    %v532 = vadd.f32 0.0, %v531
    %533 = vmatmul.f32.gmra.mxu0 %v145
    %v534 = vpop.f32.mrf.mxu0
    %v535 = vadd.f32 0.0, %v534
    %536 = vmatmul.f32.gmra.mxu0 %v146
    %v537 = vpop.f32.mrf.mxu0
    %v538 = vadd.f32 0.0, %v537
    %539 = vmatmul.f32.gmra.mxu0 %v147
    %v540 = vpop.f32.mrf.mxu0
    %v541 = vadd.f32 0.0, %v540
    %542 = vmatmul.f32.gmra.mxu0 %v148
    %v543 = vpop.f32.mrf.mxu0
    %v544 = vadd.f32 0.0, %v543
    %545 = vmatmul.f32.gmra.mxu0 %v149
    %v546 = vpop.f32.mrf.mxu0
    %v547 = vadd.f32 0.0, %v546
    %548 = vmatmul.f32.gmra.mxu0 %v150
    %v549 = vpop.f32.mrf.mxu0
    %v550 = vadd.f32 0.0, %v549
    %551 = vmatmul.f32.gmra.mxu0 %v151
    %v552 = vpop.f32.mrf.mxu0
    %v553 = vadd.f32 0.0, %v552
    %554 = vmatmul.f32.gmra.mxu0 %v152
    %v555 = vpop.f32.mrf.mxu0
    %v556 = vadd.f32 0.0, %v555
    %557 = vmatmul.f32.gmra.mxu0 %v153
    %v558 = vpop.f32.mrf.mxu0
    %v559 = vadd.f32 0.0, %v558
    %560 = vmatmul.f32.gmra.mxu0 %v154
    %v561 = vpop.f32.mrf.mxu0
    %v562 = vadd.f32 0.0, %v561
    %563 = vmatmul.f32.gmra.mxu0 %v155
    %v564 = vpop.f32.mrf.mxu0
    %v565 = vadd.f32 0.0, %v564
    %566 = vmatmul.f32.gmra.mxu0 %v156
    %v567 = vpop.f32.mrf.mxu0
    %v568 = vadd.f32 0.0, %v567
    %569 = vmatmul.f32.gmra.mxu0 %v157
    %v570 = vpop.f32.mrf.mxu0
    %v571 = vadd.f32 0.0, %v570
    %572 = vmatmul.f32.gmra.mxu0 %v158
    %v573 = vpop.f32.mrf.mxu0
    %v574 = vadd.f32 0.0, %v573
    %575 = vdwg.mxu0
    %v576 = vld [vmem:[%s2] sm:$0xff]
    %v577 = vld [vmem:[%s2 + $0x8] sm:$0xff]
    %v578 = vld [vmem:[%s2 + $0x10] sm:$0xff]
    %v579 = vld [vmem:[%s2 + $0x18] sm:$0xff]
    %v580 = vld [vmem:[%s2 + $0x20] sm:$0xff]
    %v581 = vld [vmem:[%s2 + $0x28] sm:$0xff]
    %v582 = vld [vmem:[%s2 + $0x30] sm:$0xff]
    %v583 = vld [vmem:[%s2 + $0x38] sm:$0xff]
    %v584 = vld [vmem:[%s2 + $0x40] sm:$0xff]
    %v585 = vld [vmem:[%s2 + $0x48] sm:$0xff]
    %v586 = vld [vmem:[%s2 + $0x50] sm:$0xff]
    %v587 = vld [vmem:[%s2 + $0x58] sm:$0xff]
    %v588 = vld [vmem:[%s2 + $0x60] sm:$0xff]
    %v589 = vld [vmem:[%s2 + $0x68] sm:$0xff]
    %v590 = vld [vmem:[%s2 + $0x70] sm:$0xff]
    %v591 = vld [vmem:[%s2 + $0x78] sm:$0xff]
    %v592 = vld [vmem:[%s2 + $0x80] sm:$0xff]
    %v593 = vld [vmem:[%s2 + $0x88] sm:$0xff]
    %v594 = vld [vmem:[%s2 + $0x90] sm:$0xff]
    %v595 = vld [vmem:[%s2 + $0x98] sm:$0xff]
    %v596 = vld [vmem:[%s2 + $0xa0] sm:$0xff]
    %v597 = vld [vmem:[%s2 + $0xa8] sm:$0xff]
    %v598 = vld [vmem:[%s2 + $0xb0] sm:$0xff]
    %v599 = vld [vmem:[%s2 + $0xb8] sm:$0xff]
    %v600 = vld [vmem:[%s2 + $0xc0] sm:$0xff]
    %v601 = vld [vmem:[%s2 + $0xc8] sm:$0xff]
    %v602 = vld [vmem:[%s2 + $0xd0] sm:$0xff]
    %v603 = vld [vmem:[%s2 + $0xd8] sm:$0xff]
    %v604 = vld [vmem:[%s2 + $0xe0] sm:$0xff]
    %v605 = vld [vmem:[%s2 + $0xe8] sm:$0xff]
    %v606 = vld [vmem:[%s2 + $0xf0] sm:$0xff]
    %v607 = vld [vmem:[%s2 + $0xf8] sm:$0xff]
    %v608 = vld [vmem:[%s2 + $0x100] sm:$0xff]
    %v609 = vld [vmem:[%s2 + $0x108] sm:$0xff]
    %v610 = vld [vmem:[%s2 + $0x110] sm:$0xff]
    %v611 = vld [vmem:[%s2 + $0x118] sm:$0xff]
    %v612 = vld [vmem:[%s2 + $0x120] sm:$0xff]
    %v613 = vld [vmem:[%s2 + $0x128] sm:$0xff]
    %v614 = vld [vmem:[%s2 + $0x130] sm:$0xff]
    %v615 = vld [vmem:[%s2 + $0x138] sm:$0xff]
    %v616 = vld [vmem:[%s2 + $0x140] sm:$0xff]
    %v617 = vld [vmem:[%s2 + $0x148] sm:$0xff]
    %v618 = vld [vmem:[%s2 + $0x150] sm:$0xff]
    %v619 = vld [vmem:[%s2 + $0x158] sm:$0xff]
    %v620 = vld [vmem:[%s2 + $0x160] sm:$0xff]
    %v621 = vld [vmem:[%s2 + $0x168] sm:$0xff]
    %v622 = vld [vmem:[%s2 + $0x170] sm:$0xff]
    %v623 = vld [vmem:[%s2 + $0x178] sm:$0xff]
    %v624 = vld [vmem:[%s2 + $0x180] sm:$0xff]
    %v625 = vld [vmem:[%s2 + $0x188] sm:$0xff]
    %v626 = vld [vmem:[%s2 + $0x190] sm:$0xff]
    %v627 = vld [vmem:[%s2 + $0x198] sm:$0xff]
    %v628 = vld [vmem:[%s2 + $0x1a0] sm:$0xff]
    %v629 = vld [vmem:[%s2 + $0x1a8] sm:$0xff]
    %v630 = vld [vmem:[%s2 + $0x1b0] sm:$0xff]
    %v631 = vld [vmem:[%s2 + $0x1b8] sm:$0xff]
    %v632 = vld [vmem:[%s2 + $0x1c0] sm:$0xff]
    %v633 = vld [vmem:[%s2 + $0x1c8] sm:$0xff]
    %v634 = vld [vmem:[%s2 + $0x1d0] sm:$0xff]
    %v635 = vld [vmem:[%s2 + $0x1d8] sm:$0xff]
    %v636 = vld [vmem:[%s2 + $0x1e0] sm:$0xff]
    %v637 = vld [vmem:[%s2 + $0x1e8] sm:$0xff]
    %v638 = vld [vmem:[%s2 + $0x1f0] sm:$0xff]
    %v639 = vld [vmem:[%s2 + $0x1f8] sm:$0xff]
    %v640 = vld [vmem:[%s2 + $0x200] sm:$0xff]
    %v641 = vld [vmem:[%s2 + $0x208] sm:$0xff]
    %v642 = vld [vmem:[%s2 + $0x210] sm:$0xff]
    %v643 = vld [vmem:[%s2 + $0x218] sm:$0xff]
    %v644 = vld [vmem:[%s2 + $0x220] sm:$0xff]
    %v645 = vld [vmem:[%s2 + $0x228] sm:$0xff]
    %v646 = vld [vmem:[%s2 + $0x230] sm:$0xff]
    %v647 = vld [vmem:[%s2 + $0x238] sm:$0xff]
    %v648 = vld [vmem:[%s2 + $0x240] sm:$0xff]
    %v649 = vld [vmem:[%s2 + $0x248] sm:$0xff]
    %v650 = vld [vmem:[%s2 + $0x250] sm:$0xff]
    %v651 = vld [vmem:[%s2 + $0x258] sm:$0xff]
    %v652 = vld [vmem:[%s2 + $0x260] sm:$0xff]
    %v653 = vld [vmem:[%s2 + $0x268] sm:$0xff]
    %v654 = vld [vmem:[%s2 + $0x270] sm:$0xff]
    %v655 = vld [vmem:[%s2 + $0x278] sm:$0xff]
    %v656 = vld [vmem:[%s2 + $0x280] sm:$0xff]
    %v657 = vld [vmem:[%s2 + $0x288] sm:$0xff]
    %v658 = vld [vmem:[%s2 + $0x290] sm:$0xff]
    %v659 = vld [vmem:[%s2 + $0x298] sm:$0xff]
    %v660 = vld [vmem:[%s2 + $0x2a0] sm:$0xff]
    %v661 = vld [vmem:[%s2 + $0x2a8] sm:$0xff]
    %v662 = vld [vmem:[%s2 + $0x2b0] sm:$0xff]
    %v663 = vld [vmem:[%s2 + $0x2b8] sm:$0xff]
    %v664 = vld [vmem:[%s2 + $0x2c0] sm:$0xff]
    %v665 = vld [vmem:[%s2 + $0x2c8] sm:$0xff]
    %v666 = vld [vmem:[%s2 + $0x2d0] sm:$0xff]
    %v667 = vld [vmem:[%s2 + $0x2d8] sm:$0xff]
    %v668 = vld [vmem:[%s2 + $0x2e0] sm:$0xff]
    %v669 = vld [vmem:[%s2 + $0x2e8] sm:$0xff]
    %v670 = vld [vmem:[%s2 + $0x2f0] sm:$0xff]
    %v671 = vld [vmem:[%s2 + $0x2f8] sm:$0xff]
    %v672 = vld [vmem:[%s2 + $0x300] sm:$0xff]
    %v673 = vld [vmem:[%s2 + $0x308] sm:$0xff]
    %v674 = vld [vmem:[%s2 + $0x310] sm:$0xff]
    %v675 = vld [vmem:[%s2 + $0x318] sm:$0xff]
    %v676 = vld [vmem:[%s2 + $0x320] sm:$0xff]
    %v677 = vld [vmem:[%s2 + $0x328] sm:$0xff]
    %v678 = vld [vmem:[%s2 + $0x330] sm:$0xff]
    %v679 = vld [vmem:[%s2 + $0x338] sm:$0xff]
    %v680 = vld [vmem:[%s2 + $0x340] sm:$0xff]
    %v681 = vld [vmem:[%s2 + $0x348] sm:$0xff]
    %v682 = vld [vmem:[%s2 + $0x350] sm:$0xff]
    %v683 = vld [vmem:[%s2 + $0x358] sm:$0xff]
    %v684 = vld [vmem:[%s2 + $0x360] sm:$0xff]
    %v685 = vld [vmem:[%s2 + $0x368] sm:$0xff]
    %v686 = vld [vmem:[%s2 + $0x370] sm:$0xff]
    %v687 = vld [vmem:[%s2 + $0x378] sm:$0xff]
    %v688 = vld [vmem:[%s2 + $0x380] sm:$0xff]
    %v689 = vld [vmem:[%s2 + $0x388] sm:$0xff]
    %v690 = vld [vmem:[%s2 + $0x390] sm:$0xff]
    %v691 = vld [vmem:[%s2 + $0x398] sm:$0xff]
    %v692 = vld [vmem:[%s2 + $0x3a0] sm:$0xff]
    %v693 = vld [vmem:[%s2 + $0x3a8] sm:$0xff]
    %v694 = vld [vmem:[%s2 + $0x3b0] sm:$0xff]
    %v695 = vld [vmem:[%s2 + $0x3b8] sm:$0xff]
    %v696 = vld [vmem:[%s2 + $0x3c0] sm:$0xff]
    %v697 = vld [vmem:[%s2 + $0x3c8] sm:$0xff]
    %v698 = vld [vmem:[%s2 + $0x3d0] sm:$0xff]
    %v699 = vld [vmem:[%s2 + $0x3d8] sm:$0xff]
    %v700 = vld [vmem:[%s2 + $0x3e0] sm:$0xff]
    %v701 = vld [vmem:[%s2 + $0x3e8] sm:$0xff]
    %v702 = vld [vmem:[%s2 + $0x3f0] sm:$0xff]
    %v703 = vld [vmem:[%s2 + $0x3f8] sm:$0xff]
    %705 = vset.pattern.permute.xlu0 0
    %706 = vperm.xlu0 %705, %v576
    %v707 = vpop.permute.xlu0 %706
    %710 = vset.pattern.permute.xlu0 0
    %711 = vperm.xlu0 %710, %v577
    %v712 = vpop.permute.xlu0 %711
    %715 = vset.pattern.permute.xlu0 0
    %716 = vperm.xlu0 %715, %v578
    %v717 = vpop.permute.xlu0 %716
    %720 = vset.pattern.permute.xlu0 0
    %721 = vperm.xlu0 %720, %v579
    %v722 = vpop.permute.xlu0 %721
    %725 = vset.pattern.permute.xlu0 0
    %726 = vperm.xlu0 %725, %v580
    %v727 = vpop.permute.xlu0 %726
    %730 = vset.pattern.permute.xlu0 0
    %731 = vperm.xlu0 %730, %v581
    %v732 = vpop.permute.xlu0 %731
    %735 = vset.pattern.permute.xlu0 0
    %736 = vperm.xlu0 %735, %v582
    %v737 = vpop.permute.xlu0 %736
    %740 = vset.pattern.permute.xlu0 0
    %741 = vperm.xlu0 %740, %v583
    %v742 = vpop.permute.xlu0 %741
    %745 = vset.pattern.permute.xlu0 0
    %746 = vperm.xlu0 %745, %v584
    %v747 = vpop.permute.xlu0 %746
    %750 = vset.pattern.permute.xlu0 0
    %751 = vperm.xlu0 %750, %v585
    %v752 = vpop.permute.xlu0 %751
    %755 = vset.pattern.permute.xlu0 0
    %756 = vperm.xlu0 %755, %v586
    %v757 = vpop.permute.xlu0 %756
    %760 = vset.pattern.permute.xlu0 0
    %761 = vperm.xlu0 %760, %v587
    %v762 = vpop.permute.xlu0 %761
    %765 = vset.pattern.permute.xlu0 0
    %766 = vperm.xlu0 %765, %v588
    %v767 = vpop.permute.xlu0 %766
    %770 = vset.pattern.permute.xlu0 0
    %771 = vperm.xlu0 %770, %v589
    %v772 = vpop.permute.xlu0 %771
    %775 = vset.pattern.permute.xlu0 0
    %776 = vperm.xlu0 %775, %v590
    %v777 = vpop.permute.xlu0 %776
    %780 = vset.pattern.permute.xlu0 0
    %781 = vperm.xlu0 %780, %v591
    %v782 = vpop.permute.xlu0 %781
    %785 = vset.pattern.permute.xlu0 0
    %786 = vperm.xlu0 %785, %v592
    %v787 = vpop.permute.xlu0 %786
    %790 = vset.pattern.permute.xlu0 0
    %791 = vperm.xlu0 %790, %v593
    %v792 = vpop.permute.xlu0 %791
    %795 = vset.pattern.permute.xlu0 0
    %796 = vperm.xlu0 %795, %v594
    %v797 = vpop.permute.xlu0 %796
    %800 = vset.pattern.permute.xlu0 0
    %801 = vperm.xlu0 %800, %v595
    %v802 = vpop.permute.xlu0 %801
    %805 = vset.pattern.permute.xlu0 0
    %806 = vperm.xlu0 %805, %v596
    %v807 = vpop.permute.xlu0 %806
    %810 = vset.pattern.permute.xlu0 0
    %811 = vperm.xlu0 %810, %v597
    %v812 = vpop.permute.xlu0 %811
    %815 = vset.pattern.permute.xlu0 0
    %816 = vperm.xlu0 %815, %v598
    %v817 = vpop.permute.xlu0 %816
    %820 = vset.pattern.permute.xlu0 0
    %821 = vperm.xlu0 %820, %v599
    %v822 = vpop.permute.xlu0 %821
    %825 = vset.pattern.permute.xlu0 0
    %826 = vperm.xlu0 %825, %v600
    %v827 = vpop.permute.xlu0 %826
    %830 = vset.pattern.permute.xlu0 0
    %831 = vperm.xlu0 %830, %v601
    %v832 = vpop.permute.xlu0 %831
    %835 = vset.pattern.permute.xlu0 0
    %836 = vperm.xlu0 %835, %v602
    %v837 = vpop.permute.xlu0 %836
    %840 = vset.pattern.permute.xlu0 0
    %841 = vperm.xlu0 %840, %v603
    %v842 = vpop.permute.xlu0 %841
    %845 = vset.pattern.permute.xlu0 0
    %846 = vperm.xlu0 %845, %v604
    %v847 = vpop.permute.xlu0 %846
    %850 = vset.pattern.permute.xlu0 0
    %851 = vperm.xlu0 %850, %v605
    %v852 = vpop.permute.xlu0 %851
    %855 = vset.pattern.permute.xlu0 0
    %856 = vperm.xlu0 %855, %v606
    %v857 = vpop.permute.xlu0 %856
    %860 = vset.pattern.permute.xlu0 0
    %861 = vperm.xlu0 %860, %v607
    %v862 = vpop.permute.xlu0 %861
    %865 = vset.pattern.permute.xlu0 0
    %866 = vperm.xlu0 %865, %v608
    %v867 = vpop.permute.xlu0 %866
    %870 = vset.pattern.permute.xlu0 0
    %871 = vperm.xlu0 %870, %v609
    %v872 = vpop.permute.xlu0 %871
    %875 = vset.pattern.permute.xlu0 0
    %876 = vperm.xlu0 %875, %v610
    %v877 = vpop.permute.xlu0 %876
    %880 = vset.pattern.permute.xlu0 0
    %881 = vperm.xlu0 %880, %v611
    %v882 = vpop.permute.xlu0 %881
    %885 = vset.pattern.permute.xlu0 0
    %886 = vperm.xlu0 %885, %v612
    %v887 = vpop.permute.xlu0 %886
    %890 = vset.pattern.permute.xlu0 0
    %891 = vperm.xlu0 %890, %v613
    %v892 = vpop.permute.xlu0 %891
    %895 = vset.pattern.permute.xlu0 0
    %896 = vperm.xlu0 %895, %v614
    %v897 = vpop.permute.xlu0 %896
    %900 = vset.pattern.permute.xlu0 0
    %901 = vperm.xlu0 %900, %v615
    %v902 = vpop.permute.xlu0 %901
    %905 = vset.pattern.permute.xlu0 0
    %906 = vperm.xlu0 %905, %v616
    %v907 = vpop.permute.xlu0 %906
    %910 = vset.pattern.permute.xlu0 0
    %911 = vperm.xlu0 %910, %v617
    %v912 = vpop.permute.xlu0 %911
    %915 = vset.pattern.permute.xlu0 0
    %916 = vperm.xlu0 %915, %v618
    %v917 = vpop.permute.xlu0 %916
    %920 = vset.pattern.permute.xlu0 0
    %921 = vperm.xlu0 %920, %v619
    %v922 = vpop.permute.xlu0 %921
    %925 = vset.pattern.permute.xlu0 0
    %926 = vperm.xlu0 %925, %v620
    %v927 = vpop.permute.xlu0 %926
    %930 = vset.pattern.permute.xlu0 0
    %931 = vperm.xlu0 %930, %v621
    %v932 = vpop.permute.xlu0 %931
    %935 = vset.pattern.permute.xlu0 0
    %936 = vperm.xlu0 %935, %v622
    %v937 = vpop.permute.xlu0 %936
    %940 = vset.pattern.permute.xlu0 0
    %941 = vperm.xlu0 %940, %v623
    %v942 = vpop.permute.xlu0 %941
    %945 = vset.pattern.permute.xlu0 0
    %946 = vperm.xlu0 %945, %v624
    %v947 = vpop.permute.xlu0 %946
    %950 = vset.pattern.permute.xlu0 0
    %951 = vperm.xlu0 %950, %v625
    %v952 = vpop.permute.xlu0 %951
    %955 = vset.pattern.permute.xlu0 0
    %956 = vperm.xlu0 %955, %v626
    %v957 = vpop.permute.xlu0 %956
    %960 = vset.pattern.permute.xlu0 0
    %961 = vperm.xlu0 %960, %v627
    %v962 = vpop.permute.xlu0 %961
    %965 = vset.pattern.permute.xlu0 0
    %966 = vperm.xlu0 %965, %v628
    %v967 = vpop.permute.xlu0 %966
    %970 = vset.pattern.permute.xlu0 0
    %971 = vperm.xlu0 %970, %v629
    %v972 = vpop.permute.xlu0 %971
    %975 = vset.pattern.permute.xlu0 0
    %976 = vperm.xlu0 %975, %v630
    %v977 = vpop.permute.xlu0 %976
    %980 = vset.pattern.permute.xlu0 0
    %981 = vperm.xlu0 %980, %v631
    %v982 = vpop.permute.xlu0 %981
    %985 = vset.pattern.permute.xlu0 0
    %986 = vperm.xlu0 %985, %v632
    %v987 = vpop.permute.xlu0 %986
    %990 = vset.pattern.permute.xlu0 0
    %991 = vperm.xlu0 %990, %v633
    %v992 = vpop.permute.xlu0 %991
    %995 = vset.pattern.permute.xlu0 0
    %996 = vperm.xlu0 %995, %v634
    %v997 = vpop.permute.xlu0 %996
    %1000 = vset.pattern.permute.xlu0 0
    %1001 = vperm.xlu0 %1000, %v635
    %v1002 = vpop.permute.xlu0 %1001
    %1005 = vset.pattern.permute.xlu0 0
    %1006 = vperm.xlu0 %1005, %v636
    %v1007 = vpop.permute.xlu0 %1006
    %1010 = vset.pattern.permute.xlu0 0
    %1011 = vperm.xlu0 %1010, %v637
    %v1012 = vpop.permute.xlu0 %1011
    %1015 = vset.pattern.permute.xlu0 0
    %1016 = vperm.xlu0 %1015, %v638
    %v1017 = vpop.permute.xlu0 %1016
    %1020 = vset.pattern.permute.xlu0 0
    %1021 = vperm.xlu0 %1020, %v639
    %v1022 = vpop.permute.xlu0 %1021
    %1025 = vset.pattern.permute.xlu0 0
    %1026 = vperm.xlu0 %1025, %v640
    %v1027 = vpop.permute.xlu0 %1026
    %1030 = vset.pattern.permute.xlu0 0
    %1031 = vperm.xlu0 %1030, %v641
    %v1032 = vpop.permute.xlu0 %1031
    %1035 = vset.pattern.permute.xlu0 0
    %1036 = vperm.xlu0 %1035, %v642
    %v1037 = vpop.permute.xlu0 %1036
    %1040 = vset.pattern.permute.xlu0 0
    %1041 = vperm.xlu0 %1040, %v643
    %v1042 = vpop.permute.xlu0 %1041
    %1045 = vset.pattern.permute.xlu0 0
    %1046 = vperm.xlu0 %1045, %v644
    %v1047 = vpop.permute.xlu0 %1046
    %1050 = vset.pattern.permute.xlu0 0
    %1051 = vperm.xlu0 %1050, %v645
    %v1052 = vpop.permute.xlu0 %1051
    %1055 = vset.pattern.permute.xlu0 0
    %1056 = vperm.xlu0 %1055, %v646
    %v1057 = vpop.permute.xlu0 %1056
    %1060 = vset.pattern.permute.xlu0 0
    %1061 = vperm.xlu0 %1060, %v647
    %v1062 = vpop.permute.xlu0 %1061
    %1065 = vset.pattern.permute.xlu0 0
    %1066 = vperm.xlu0 %1065, %v648
    %v1067 = vpop.permute.xlu0 %1066
    %1070 = vset.pattern.permute.xlu0 0
    %1071 = vperm.xlu0 %1070, %v649
    %v1072 = vpop.permute.xlu0 %1071
    %1075 = vset.pattern.permute.xlu0 0
    %1076 = vperm.xlu0 %1075, %v650
    %v1077 = vpop.permute.xlu0 %1076
    %1080 = vset.pattern.permute.xlu0 0
    %1081 = vperm.xlu0 %1080, %v651
    %v1082 = vpop.permute.xlu0 %1081
    %1085 = vset.pattern.permute.xlu0 0
    %1086 = vperm.xlu0 %1085, %v652
    %v1087 = vpop.permute.xlu0 %1086
    %1090 = vset.pattern.permute.xlu0 0
    %1091 = vperm.xlu0 %1090, %v653
    %v1092 = vpop.permute.xlu0 %1091
    %1095 = vset.pattern.permute.xlu0 0
    %1096 = vperm.xlu0 %1095, %v654
    %v1097 = vpop.permute.xlu0 %1096
    %1100 = vset.pattern.permute.xlu0 0
    %1101 = vperm.xlu0 %1100, %v655
    %v1102 = vpop.permute.xlu0 %1101
    %1105 = vset.pattern.permute.xlu0 0
    %1106 = vperm.xlu0 %1105, %v656
    %v1107 = vpop.permute.xlu0 %1106
    %1110 = vset.pattern.permute.xlu0 0
    %1111 = vperm.xlu0 %1110, %v657
    %v1112 = vpop.permute.xlu0 %1111
    %1115 = vset.pattern.permute.xlu0 0
    %1116 = vperm.xlu0 %1115, %v658
    %v1117 = vpop.permute.xlu0 %1116
    %1120 = vset.pattern.permute.xlu0 0
    %1121 = vperm.xlu0 %1120, %v659
    %v1122 = vpop.permute.xlu0 %1121
    %1125 = vset.pattern.permute.xlu0 0
    %1126 = vperm.xlu0 %1125, %v660
    %v1127 = vpop.permute.xlu0 %1126
    %1130 = vset.pattern.permute.xlu0 0
    %1131 = vperm.xlu0 %1130, %v661
    %v1132 = vpop.permute.xlu0 %1131
    %1135 = vset.pattern.permute.xlu0 0
    %1136 = vperm.xlu0 %1135, %v662
    %v1137 = vpop.permute.xlu0 %1136
    %1140 = vset.pattern.permute.xlu0 0
    %1141 = vperm.xlu0 %1140, %v663
    %v1142 = vpop.permute.xlu0 %1141
    %1145 = vset.pattern.permute.xlu0 0
    %1146 = vperm.xlu0 %1145, %v664
    %v1147 = vpop.permute.xlu0 %1146
    %1150 = vset.pattern.permute.xlu0 0
    %1151 = vperm.xlu0 %1150, %v665
    %v1152 = vpop.permute.xlu0 %1151
    %1155 = vset.pattern.permute.xlu0 0
    %1156 = vperm.xlu0 %1155, %v666
    %v1157 = vpop.permute.xlu0 %1156
    %1160 = vset.pattern.permute.xlu0 0
    %1161 = vperm.xlu0 %1160, %v667
    %v1162 = vpop.permute.xlu0 %1161
    %1165 = vset.pattern.permute.xlu0 0
    %1166 = vperm.xlu0 %1165, %v668
    %v1167 = vpop.permute.xlu0 %1166
    %1170 = vset.pattern.permute.xlu0 0
    %1171 = vperm.xlu0 %1170, %v669
    %v1172 = vpop.permute.xlu0 %1171
    %1175 = vset.pattern.permute.xlu0 0
    %1176 = vperm.xlu0 %1175, %v670
    %v1177 = vpop.permute.xlu0 %1176
    %1180 = vset.pattern.permute.xlu0 0
    %1181 = vperm.xlu0 %1180, %v671
    %v1182 = vpop.permute.xlu0 %1181
    %1185 = vset.pattern.permute.xlu0 0
    %1186 = vperm.xlu0 %1185, %v672
    %v1187 = vpop.permute.xlu0 %1186
    %1190 = vset.pattern.permute.xlu0 0
    %1191 = vperm.xlu0 %1190, %v673
    %v1192 = vpop.permute.xlu0 %1191
    %1195 = vset.pattern.permute.xlu0 0
    %1196 = vperm.xlu0 %1195, %v674
    %v1197 = vpop.permute.xlu0 %1196
    %1200 = vset.pattern.permute.xlu0 0
    %1201 = vperm.xlu0 %1200, %v675
    %v1202 = vpop.permute.xlu0 %1201
    %1205 = vset.pattern.permute.xlu0 0
    %1206 = vperm.xlu0 %1205, %v676
    %v1207 = vpop.permute.xlu0 %1206
    %1210 = vset.pattern.permute.xlu0 0
    %1211 = vperm.xlu0 %1210, %v677
    %v1212 = vpop.permute.xlu0 %1211
    %1215 = vset.pattern.permute.xlu0 0
    %1216 = vperm.xlu0 %1215, %v678
    %v1217 = vpop.permute.xlu0 %1216
    %1220 = vset.pattern.permute.xlu0 0
    %1221 = vperm.xlu0 %1220, %v679
    %v1222 = vpop.permute.xlu0 %1221
    %1225 = vset.pattern.permute.xlu0 0
    %1226 = vperm.xlu0 %1225, %v680
    %v1227 = vpop.permute.xlu0 %1226
    %1230 = vset.pattern.permute.xlu0 0
    %1231 = vperm.xlu0 %1230, %v681
    %v1232 = vpop.permute.xlu0 %1231
    %1235 = vset.pattern.permute.xlu0 0
    %1236 = vperm.xlu0 %1235, %v682
    %v1237 = vpop.permute.xlu0 %1236
    %1240 = vset.pattern.permute.xlu0 0
    %1241 = vperm.xlu0 %1240, %v683
    %v1242 = vpop.permute.xlu0 %1241
    %1245 = vset.pattern.permute.xlu0 0
    %1246 = vperm.xlu0 %1245, %v684
    %v1247 = vpop.permute.xlu0 %1246
    %1250 = vset.pattern.permute.xlu0 0
    %1251 = vperm.xlu0 %1250, %v685
    %v1252 = vpop.permute.xlu0 %1251
    %1255 = vset.pattern.permute.xlu0 0
    %1256 = vperm.xlu0 %1255, %v686
    %v1257 = vpop.permute.xlu0 %1256
    %1260 = vset.pattern.permute.xlu0 0
    %1261 = vperm.xlu0 %1260, %v687
    %v1262 = vpop.permute.xlu0 %1261
    %1265 = vset.pattern.permute.xlu0 0
    %1266 = vperm.xlu0 %1265, %v688
    %v1267 = vpop.permute.xlu0 %1266
    %1270 = vset.pattern.permute.xlu0 0
    %1271 = vperm.xlu0 %1270, %v689
    %v1272 = vpop.permute.xlu0 %1271
    %1275 = vset.pattern.permute.xlu0 0
    %1276 = vperm.xlu0 %1275, %v690
    %v1277 = vpop.permute.xlu0 %1276
    %1280 = vset.pattern.permute.xlu0 0
    %1281 = vperm.xlu0 %1280, %v691
    %v1282 = vpop.permute.xlu0 %1281
    %1285 = vset.pattern.permute.xlu0 0
    %1286 = vperm.xlu0 %1285, %v692
    %v1287 = vpop.permute.xlu0 %1286
    %1290 = vset.pattern.permute.xlu0 0
    %1291 = vperm.xlu0 %1290, %v693
    %v1292 = vpop.permute.xlu0 %1291
    %1295 = vset.pattern.permute.xlu0 0
    %1296 = vperm.xlu0 %1295, %v694
    %v1297 = vpop.permute.xlu0 %1296
    %1300 = vset.pattern.permute.xlu0 0
    %1301 = vperm.xlu0 %1300, %v695
    %v1302 = vpop.permute.xlu0 %1301
    %1305 = vset.pattern.permute.xlu0 0
    %1306 = vperm.xlu0 %1305, %v696
    %v1307 = vpop.permute.xlu0 %1306
    %1310 = vset.pattern.permute.xlu0 0
    %1311 = vperm.xlu0 %1310, %v697
    %v1312 = vpop.permute.xlu0 %1311
    %1315 = vset.pattern.permute.xlu0 0
    %1316 = vperm.xlu0 %1315, %v698
    %v1317 = vpop.permute.xlu0 %1316
    %1320 = vset.pattern.permute.xlu0 0
    %1321 = vperm.xlu0 %1320, %v699
    %v1322 = vpop.permute.xlu0 %1321
    %1325 = vset.pattern.permute.xlu0 0
    %1326 = vperm.xlu0 %1325, %v700
    %v1327 = vpop.permute.xlu0 %1326
    %1330 = vset.pattern.permute.xlu0 0
    %1331 = vperm.xlu0 %1330, %v701
    %v1332 = vpop.permute.xlu0 %1331
    %1335 = vset.pattern.permute.xlu0 0
    %1336 = vperm.xlu0 %1335, %v702
    %v1337 = vpop.permute.xlu0 %1336
    %1340 = vset.pattern.permute.xlu0 0
    %1341 = vperm.xlu0 %1340, %v703
    %v1342 = vpop.permute.xlu0 %1341
    %v1344 = vmul.f32 %v193, %v707
    %v1345 = vmul.f32 %v196, %v712
    %v1346 = vmul.f32 %v199, %v717
    %v1347 = vmul.f32 %v202, %v722
    %v1348 = vmul.f32 %v205, %v727
    %v1349 = vmul.f32 %v208, %v732
    %v1350 = vmul.f32 %v211, %v737
    %v1351 = vmul.f32 %v214, %v742
    %v1352 = vmul.f32 %v217, %v747
    %v1353 = vmul.f32 %v220, %v752
    %v1354 = vmul.f32 %v223, %v757
    %v1355 = vmul.f32 %v226, %v762
    %v1356 = vmul.f32 %v229, %v767
    %v1357 = vmul.f32 %v232, %v772
    %v1358 = vmul.f32 %v235, %v777
    %v1359 = vmul.f32 %v238, %v782
    %v1360 = vmul.f32 %v241, %v787
    %v1361 = vmul.f32 %v244, %v792
    %v1362 = vmul.f32 %v247, %v797
    %v1363 = vmul.f32 %v250, %v802
    %v1364 = vmul.f32 %v253, %v807
    %v1365 = vmul.f32 %v256, %v812
    %v1366 = vmul.f32 %v259, %v817
    %v1367 = vmul.f32 %v262, %v822
    %v1368 = vmul.f32 %v265, %v827
    %v1369 = vmul.f32 %v268, %v832
    %v1370 = vmul.f32 %v271, %v837
    %v1371 = vmul.f32 %v274, %v842
    %v1372 = vmul.f32 %v277, %v847
    %v1373 = vmul.f32 %v280, %v852
    %v1374 = vmul.f32 %v283, %v857
    %v1375 = vmul.f32 %v286, %v862
    %v1376 = vmul.f32 %v289, %v867
    %v1377 = vmul.f32 %v292, %v872
    %v1378 = vmul.f32 %v295, %v877
    %v1379 = vmul.f32 %v298, %v882
    %v1380 = vmul.f32 %v301, %v887
    %v1381 = vmul.f32 %v304, %v892
    %v1382 = vmul.f32 %v307, %v897
    %v1383 = vmul.f32 %v310, %v902
    %v1384 = vmul.f32 %v313, %v907
    %v1385 = vmul.f32 %v316, %v912
    %v1386 = vmul.f32 %v319, %v917
    %v1387 = vmul.f32 %v322, %v922
    %v1388 = vmul.f32 %v325, %v927
    %v1389 = vmul.f32 %v328, %v932
    %v1390 = vmul.f32 %v331, %v937
    %v1391 = vmul.f32 %v334, %v942
    %v1392 = vmul.f32 %v337, %v947
    %v1393 = vmul.f32 %v340, %v952
    %v1394 = vmul.f32 %v343, %v957
    %v1395 = vmul.f32 %v346, %v962
    %v1396 = vmul.f32 %v349, %v967
    %v1397 = vmul.f32 %v352, %v972
    %v1398 = vmul.f32 %v355, %v977
    %v1399 = vmul.f32 %v358, %v982
    %v1400 = vmul.f32 %v361, %v987
    %v1401 = vmul.f32 %v364, %v992
    %v1402 = vmul.f32 %v367, %v997
    %v1403 = vmul.f32 %v370, %v1002
    %v1404 = vmul.f32 %v373, %v1007
    %v1405 = vmul.f32 %v376, %v1012
    %v1406 = vmul.f32 %v379, %v1017
    %v1407 = vmul.f32 %v382, %v1022
    %v1408 = vmul.f32 %v385, %v1027
    %v1409 = vmul.f32 %v388, %v1032
    %v1410 = vmul.f32 %v391, %v1037
    %v1411 = vmul.f32 %v394, %v1042
    %v1412 = vmul.f32 %v397, %v1047
    %v1413 = vmul.f32 %v400, %v1052
    %v1414 = vmul.f32 %v403, %v1057
    %v1415 = vmul.f32 %v406, %v1062
    %v1416 = vmul.f32 %v409, %v1067
    %v1417 = vmul.f32 %v412, %v1072
    %v1418 = vmul.f32 %v415, %v1077
    %v1419 = vmul.f32 %v418, %v1082
    %v1420 = vmul.f32 %v421, %v1087
    %v1421 = vmul.f32 %v424, %v1092
    %v1422 = vmul.f32 %v427, %v1097
    %v1423 = vmul.f32 %v430, %v1102
    %v1424 = vmul.f32 %v433, %v1107
    %v1425 = vmul.f32 %v436, %v1112
    %v1426 = vmul.f32 %v439, %v1117
    %v1427 = vmul.f32 %v442, %v1122
    %v1428 = vmul.f32 %v445, %v1127
    %v1429 = vmul.f32 %v448, %v1132
    %v1430 = vmul.f32 %v451, %v1137
    %v1431 = vmul.f32 %v454, %v1142
    %v1432 = vmul.f32 %v457, %v1147
    %v1433 = vmul.f32 %v460, %v1152
    %v1434 = vmul.f32 %v463, %v1157
    %v1435 = vmul.f32 %v466, %v1162
    %v1436 = vmul.f32 %v469, %v1167
    %v1437 = vmul.f32 %v472, %v1172
    %v1438 = vmul.f32 %v475, %v1177
    %v1439 = vmul.f32 %v478, %v1182
    %v1440 = vmul.f32 %v481, %v1187
    %v1441 = vmul.f32 %v484, %v1192
    %v1442 = vmul.f32 %v487, %v1197
    %v1443 = vmul.f32 %v490, %v1202
    %v1444 = vmul.f32 %v493, %v1207
    %v1445 = vmul.f32 %v496, %v1212
    %v1446 = vmul.f32 %v499, %v1217
    %v1447 = vmul.f32 %v502, %v1222
    %v1448 = vmul.f32 %v505, %v1227
    %v1449 = vmul.f32 %v508, %v1232
    %v1450 = vmul.f32 %v511, %v1237
    %v1451 = vmul.f32 %v514, %v1242
    %v1452 = vmul.f32 %v517, %v1247
    %v1453 = vmul.f32 %v520, %v1252
    %v1454 = vmul.f32 %v523, %v1257
    %v1455 = vmul.f32 %v526, %v1262
    %v1456 = vmul.f32 %v529, %v1267
    %v1457 = vmul.f32 %v532, %v1272
    %v1458 = vmul.f32 %v535, %v1277
    %v1459 = vmul.f32 %v538, %v1282
    %v1460 = vmul.f32 %v541, %v1287
    %v1461 = vmul.f32 %v544, %v1292
    %v1462 = vmul.f32 %v547, %v1297
    %v1463 = vmul.f32 %v550, %v1302
    %v1464 = vmul.f32 %v553, %v1307
    %v1465 = vmul.f32 %v556, %v1312
    %v1466 = vmul.f32 %v559, %v1317
    %v1467 = vmul.f32 %v562, %v1322
    %v1468 = vmul.f32 %v565, %v1327
    %v1469 = vmul.f32 %v568, %v1332
    %v1470 = vmul.f32 %v571, %v1337
    %v1471 = vmul.f32 %v574, %v1342
    %v1472 = vpack.c.bf16 %v1344, %v1344
    %v1473 = vpack.c.bf16 %v1345, %v1345
    %v1474 = vpack.c.bf16 %v1346, %v1346
    %v1475 = vpack.c.bf16 %v1347, %v1347
    %v1476 = vpack.c.bf16 %v1348, %v1348
    %v1477 = vpack.c.bf16 %v1349, %v1349
    %v1478 = vpack.c.bf16 %v1350, %v1350
    %v1479 = vpack.c.bf16 %v1351, %v1351
    %v1480 = vpack.c.bf16 %v1352, %v1352
    %v1481 = vpack.c.bf16 %v1353, %v1353
    %v1482 = vpack.c.bf16 %v1354, %v1354
    %v1483 = vpack.c.bf16 %v1355, %v1355
    %v1484 = vpack.c.bf16 %v1356, %v1356
    %v1485 = vpack.c.bf16 %v1357, %v1357
    %v1486 = vpack.c.bf16 %v1358, %v1358
    %v1487 = vpack.c.bf16 %v1359, %v1359
    %v1488 = vpack.c.bf16 %v1360, %v1360
    %v1489 = vpack.c.bf16 %v1361, %v1361
    %v1490 = vpack.c.bf16 %v1362, %v1362
    %v1491 = vpack.c.bf16 %v1363, %v1363
    %v1492 = vpack.c.bf16 %v1364, %v1364
    %v1493 = vpack.c.bf16 %v1365, %v1365
    %v1494 = vpack.c.bf16 %v1366, %v1366
    %v1495 = vpack.c.bf16 %v1367, %v1367
    %v1496 = vpack.c.bf16 %v1368, %v1368
    %v1497 = vpack.c.bf16 %v1369, %v1369
    %v1498 = vpack.c.bf16 %v1370, %v1370
    %v1499 = vpack.c.bf16 %v1371, %v1371
    %v1500 = vpack.c.bf16 %v1372, %v1372
    %v1501 = vpack.c.bf16 %v1373, %v1373
    %v1502 = vpack.c.bf16 %v1374, %v1374
    %v1503 = vpack.c.bf16 %v1375, %v1375
    %v1504 = vpack.c.bf16 %v1376, %v1376
    %v1505 = vpack.c.bf16 %v1377, %v1377
    %v1506 = vpack.c.bf16 %v1378, %v1378
    %v1507 = vpack.c.bf16 %v1379, %v1379
    %v1508 = vpack.c.bf16 %v1380, %v1380
    %v1509 = vpack.c.bf16 %v1381, %v1381
    %v1510 = vpack.c.bf16 %v1382, %v1382
    %v1511 = vpack.c.bf16 %v1383, %v1383
    %v1512 = vpack.c.bf16 %v1384, %v1384
    %v1513 = vpack.c.bf16 %v1385, %v1385
    %v1514 = vpack.c.bf16 %v1386, %v1386
    %v1515 = vpack.c.bf16 %v1387, %v1387
    %v1516 = vpack.c.bf16 %v1388, %v1388
    %v1517 = vpack.c.bf16 %v1389, %v1389
    %v1518 = vpack.c.bf16 %v1390, %v1390
    %v1519 = vpack.c.bf16 %v1391, %v1391
    %v1520 = vpack.c.bf16 %v1392, %v1392
    %v1521 = vpack.c.bf16 %v1393, %v1393
    %v1522 = vpack.c.bf16 %v1394, %v1394
    %v1523 = vpack.c.bf16 %v1395, %v1395
    %v1524 = vpack.c.bf16 %v1396, %v1396
    %v1525 = vpack.c.bf16 %v1397, %v1397
    %v1526 = vpack.c.bf16 %v1398, %v1398
    %v1527 = vpack.c.bf16 %v1399, %v1399
    %v1528 = vpack.c.bf16 %v1400, %v1400
    %v1529 = vpack.c.bf16 %v1401, %v1401
    %v1530 = vpack.c.bf16 %v1402, %v1402
    %v1531 = vpack.c.bf16 %v1403, %v1403
    %v1532 = vpack.c.bf16 %v1404, %v1404
    %v1533 = vpack.c.bf16 %v1405, %v1405
    %v1534 = vpack.c.bf16 %v1406, %v1406
    %v1535 = vpack.c.bf16 %v1407, %v1407
    %v1536 = vpack.c.bf16 %v1408, %v1408
    %v1537 = vpack.c.bf16 %v1409, %v1409
    %v1538 = vpack.c.bf16 %v1410, %v1410
    %v1539 = vpack.c.bf16 %v1411, %v1411
    %v1540 = vpack.c.bf16 %v1412, %v1412
    %v1541 = vpack.c.bf16 %v1413, %v1413
    %v1542 = vpack.c.bf16 %v1414, %v1414
    %v1543 = vpack.c.bf16 %v1415, %v1415
    %v1544 = vpack.c.bf16 %v1416, %v1416
    %v1545 = vpack.c.bf16 %v1417, %v1417
    %v1546 = vpack.c.bf16 %v1418, %v1418
    %v1547 = vpack.c.bf16 %v1419, %v1419
    %v1548 = vpack.c.bf16 %v1420, %v1420
    %v1549 = vpack.c.bf16 %v1421, %v1421
    %v1550 = vpack.c.bf16 %v1422, %v1422
    %v1551 = vpack.c.bf16 %v1423, %v1423
    %v1552 = vpack.c.bf16 %v1424, %v1424
    %v1553 = vpack.c.bf16 %v1425, %v1425
    %v1554 = vpack.c.bf16 %v1426, %v1426
    %v1555 = vpack.c.bf16 %v1427, %v1427
    %v1556 = vpack.c.bf16 %v1428, %v1428
    %v1557 = vpack.c.bf16 %v1429, %v1429
    %v1558 = vpack.c.bf16 %v1430, %v1430
    %v1559 = vpack.c.bf16 %v1431, %v1431
    %v1560 = vpack.c.bf16 %v1432, %v1432
    %v1561 = vpack.c.bf16 %v1433, %v1433
    %v1562 = vpack.c.bf16 %v1434, %v1434
    %v1563 = vpack.c.bf16 %v1435, %v1435
    %v1564 = vpack.c.bf16 %v1436, %v1436
    %v1565 = vpack.c.bf16 %v1437, %v1437
    %v1566 = vpack.c.bf16 %v1438, %v1438
    %v1567 = vpack.c.bf16 %v1439, %v1439
    %v1568 = vpack.c.bf16 %v1440, %v1440
    %v1569 = vpack.c.bf16 %v1441, %v1441
    %v1570 = vpack.c.bf16 %v1442, %v1442
    %v1571 = vpack.c.bf16 %v1443, %v1443
    %v1572 = vpack.c.bf16 %v1444, %v1444
    %v1573 = vpack.c.bf16 %v1445, %v1445
    %v1574 = vpack.c.bf16 %v1446, %v1446
    %v1575 = vpack.c.bf16 %v1447, %v1447
    %v1576 = vpack.c.bf16 %v1448, %v1448
    %v1577 = vpack.c.bf16 %v1449, %v1449
    %v1578 = vpack.c.bf16 %v1450, %v1450
    %v1579 = vpack.c.bf16 %v1451, %v1451
    %v1580 = vpack.c.bf16 %v1452, %v1452
    %v1581 = vpack.c.bf16 %v1453, %v1453
    %v1582 = vpack.c.bf16 %v1454, %v1454
    %v1583 = vpack.c.bf16 %v1455, %v1455
    %v1584 = vpack.c.bf16 %v1456, %v1456
    %v1585 = vpack.c.bf16 %v1457, %v1457
    %v1586 = vpack.c.bf16 %v1458, %v1458
    %v1587 = vpack.c.bf16 %v1459, %v1459
    %v1588 = vpack.c.bf16 %v1460, %v1460
    %v1589 = vpack.c.bf16 %v1461, %v1461
    %v1590 = vpack.c.bf16 %v1462, %v1462
    %v1591 = vpack.c.bf16 %v1463, %v1463
    %v1592 = vpack.c.bf16 %v1464, %v1464
    %v1593 = vpack.c.bf16 %v1465, %v1465
    %v1594 = vpack.c.bf16 %v1466, %v1466
    %v1595 = vpack.c.bf16 %v1467, %v1467
    %v1596 = vpack.c.bf16 %v1468, %v1468
    %v1597 = vpack.c.bf16 %v1469, %v1469
    %v1598 = vpack.c.bf16 %v1470, %v1470
    %v1599 = vpack.c.bf16 %v1471, %v1471
    %1600 = vst [vmem:[#allocation5] sm:$0xf] %v1472
    %1601 = vst [vmem:[#allocation5 + $0x4] sm:$0xf] %v1473
    %1602 = vst [vmem:[#allocation5 + $0x8] sm:$0xf] %v1474
    %1603 = vst [vmem:[#allocation5 + $0xc] sm:$0xf] %v1475
    %1604 = vst [vmem:[#allocation5 + $0x10] sm:$0xf] %v1476
    %1605 = vst [vmem:[#allocation5 + $0x14] sm:$0xf] %v1477
    %1606 = vst [vmem:[#allocation5 + $0x18] sm:$0xf] %v1478
    %1607 = vst [vmem:[#allocation5 + $0x1c] sm:$0xf] %v1479
    %1608 = vst [vmem:[#allocation5 + $0x20] sm:$0xf] %v1480
    %1609 = vst [vmem:[#allocation5 + $0x24] sm:$0xf] %v1481
    %1610 = vst [vmem:[#allocation5 + $0x28] sm:$0xf] %v1482
    %1611 = vst [vmem:[#allocation5 + $0x2c] sm:$0xf] %v1483
    %1612 = vst [vmem:[#allocation5 + $0x30] sm:$0xf] %v1484
    %1613 = vst [vmem:[#allocation5 + $0x34] sm:$0xf] %v1485
    %1614 = vst [vmem:[#allocation5 + $0x38] sm:$0xf] %v1486
    %1615 = vst [vmem:[#allocation5 + $0x3c] sm:$0xf] %v1487
    %1616 = vst [vmem:[#allocation5 + $0x40] sm:$0xf] %v1488
    %1617 = vst [vmem:[#allocation5 + $0x44] sm:$0xf] %v1489
    %1618 = vst [vmem:[#allocation5 + $0x48] sm:$0xf] %v1490
    %1619 = vst [vmem:[#allocation5 + $0x4c] sm:$0xf] %v1491
    %1620 = vst [vmem:[#allocation5 + $0x50] sm:$0xf] %v1492
    %1621 = vst [vmem:[#allocation5 + $0x54] sm:$0xf] %v1493
    %1622 = vst [vmem:[#allocation5 + $0x58] sm:$0xf] %v1494
    %1623 = vst [vmem:[#allocation5 + $0x5c] sm:$0xf] %v1495
    %1624 = vst [vmem:[#allocation5 + $0x60] sm:$0xf] %v1496
    %1625 = vst [vmem:[#allocation5 + $0x64] sm:$0xf] %v1497
    %1626 = vst [vmem:[#allocation5 + $0x68] sm:$0xf] %v1498
    %1627 = vst [vmem:[#allocation5 + $0x6c] sm:$0xf] %v1499
    %1628 = vst [vmem:[#allocation5 + $0x70] sm:$0xf] %v1500
    %1629 = vst [vmem:[#allocation5 + $0x74] sm:$0xf] %v1501
    %1630 = vst [vmem:[#allocation5 + $0x78] sm:$0xf] %v1502
    %1631 = vst [vmem:[#allocation5 + $0x7c] sm:$0xf] %v1503
    %1632 = vst [vmem:[#allocation5 + $0x80] sm:$0xf] %v1504
    %1633 = vst [vmem:[#allocation5 + $0x84] sm:$0xf] %v1505
    %1634 = vst [vmem:[#allocation5 + $0x88] sm:$0xf] %v1506
    %1635 = vst [vmem:[#allocation5 + $0x8c] sm:$0xf] %v1507
    %1636 = vst [vmem:[#allocation5 + $0x90] sm:$0xf] %v1508
    %1637 = vst [vmem:[#allocation5 + $0x94] sm:$0xf] %v1509
    %1638 = vst [vmem:[#allocation5 + $0x98] sm:$0xf] %v1510
    %1639 = vst [vmem:[#allocation5 + $0x9c] sm:$0xf] %v1511
    %1640 = vst [vmem:[#allocation5 + $0xa0] sm:$0xf] %v1512
    %1641 = vst [vmem:[#allocation5 + $0xa4] sm:$0xf] %v1513
    %1642 = vst [vmem:[#allocation5 + $0xa8] sm:$0xf] %v1514
    %1643 = vst [vmem:[#allocation5 + $0xac] sm:$0xf] %v1515
    %1644 = vst [vmem:[#allocation5 + $0xb0] sm:$0xf] %v1516
    %1645 = vst [vmem:[#allocation5 + $0xb4] sm:$0xf] %v1517
    %1646 = vst [vmem:[#allocation5 + $0xb8] sm:$0xf] %v1518
    %1647 = vst [vmem:[#allocation5 + $0xbc] sm:$0xf] %v1519
    %1648 = vst [vmem:[#allocation5 + $0xc0] sm:$0xf] %v1520
    %1649 = vst [vmem:[#allocation5 + $0xc4] sm:$0xf] %v1521
    %1650 = vst [vmem:[#allocation5 + $0xc8] sm:$0xf] %v1522
    %1651 = vst [vmem:[#allocation5 + $0xcc] sm:$0xf] %v1523
    %1652 = vst [vmem:[#allocation5 + $0xd0] sm:$0xf] %v1524
    %1653 = vst [vmem:[#allocation5 + $0xd4] sm:$0xf] %v1525
    %1654 = vst [vmem:[#allocation5 + $0xd8] sm:$0xf] %v1526
    %1655 = vst [vmem:[#allocation5 + $0xdc] sm:$0xf] %v1527
    %1656 = vst [vmem:[#allocation5 + $0xe0] sm:$0xf] %v1528
    %1657 = vst [vmem:[#allocation5 + $0xe4] sm:$0xf] %v1529
    %1658 = vst [vmem:[#allocation5 + $0xe8] sm:$0xf] %v1530
    %1659 = vst [vmem:[#allocation5 + $0xec] sm:$0xf] %v1531
    %1660 = vst [vmem:[#allocation5 + $0xf0] sm:$0xf] %v1532
    %1661 = vst [vmem:[#allocation5 + $0xf4] sm:$0xf] %v1533
    %1662 = vst [vmem:[#allocation5 + $0xf8] sm:$0xf] %v1534
    %1663 = vst [vmem:[#allocation5 + $0xfc] sm:$0xf] %v1535
    %1664 = vst [vmem:[#allocation5 + $0x100] sm:$0xf] %v1536
    %1665 = vst [vmem:[#allocation5 + $0x104] sm:$0xf] %v1537
    %1666 = vst [vmem:[#allocation5 + $0x108] sm:$0xf] %v1538
    %1667 = vst [vmem:[#allocation5 + $0x10c] sm:$0xf] %v1539
    %1668 = vst [vmem:[#allocation5 + $0x110] sm:$0xf] %v1540
    %1669 = vst [vmem:[#allocation5 + $0x114] sm:$0xf] %v1541
    %1670 = vst [vmem:[#allocation5 + $0x118] sm:$0xf] %v1542
    %1671 = vst [vmem:[#allocation5 + $0x11c] sm:$0xf] %v1543
    %1672 = vst [vmem:[#allocation5 + $0x120] sm:$0xf] %v1544
    %1673 = vst [vmem:[#allocation5 + $0x124] sm:$0xf] %v1545
    %1674 = vst [vmem:[#allocation5 + $0x128] sm:$0xf] %v1546
    %1675 = vst [vmem:[#allocation5 + $0x12c] sm:$0xf] %v1547
    %1676 = vst [vmem:[#allocation5 + $0x130] sm:$0xf] %v1548
    %1677 = vst [vmem:[#allocation5 + $0x134] sm:$0xf] %v1549
    %1678 = vst [vmem:[#allocation5 + $0x138] sm:$0xf] %v1550
    %1679 = vst [vmem:[#allocation5 + $0x13c] sm:$0xf] %v1551
    %1680 = vst [vmem:[#allocation5 + $0x140] sm:$0xf] %v1552
    %1681 = vst [vmem:[#allocation5 + $0x144] sm:$0xf] %v1553
    %1682 = vst [vmem:[#allocation5 + $0x148] sm:$0xf] %v1554
    %1683 = vst [vmem:[#allocation5 + $0x14c] sm:$0xf] %v1555
    %1684 = vst [vmem:[#allocation5 + $0x150] sm:$0xf] %v1556
    %1685 = vst [vmem:[#allocation5 + $0x154] sm:$0xf] %v1557
    %1686 = vst [vmem:[#allocation5 + $0x158] sm:$0xf] %v1558
    %1687 = vst [vmem:[#allocation5 + $0x15c] sm:$0xf] %v1559
    %1688 = vst [vmem:[#allocation5 + $0x160] sm:$0xf] %v1560
    %1689 = vst [vmem:[#allocation5 + $0x164] sm:$0xf] %v1561
    %1690 = vst [vmem:[#allocation5 + $0x168] sm:$0xf] %v1562
    %1691 = vst [vmem:[#allocation5 + $0x16c] sm:$0xf] %v1563
    %1692 = vst [vmem:[#allocation5 + $0x170] sm:$0xf] %v1564
    %1693 = vst [vmem:[#allocation5 + $0x174] sm:$0xf] %v1565
    %1694 = vst [vmem:[#allocation5 + $0x178] sm:$0xf] %v1566
    %1695 = vst [vmem:[#allocation5 + $0x17c] sm:$0xf] %v1567
    %1696 = vst [vmem:[#allocation5 + $0x180] sm:$0xf] %v1568
    %1697 = vst [vmem:[#allocation5 + $0x184] sm:$0xf] %v1569
    %1698 = vst [vmem:[#allocation5 + $0x188] sm:$0xf] %v1570
    %1699 = vst [vmem:[#allocation5 + $0x18c] sm:$0xf] %v1571
    %1700 = vst [vmem:[#allocation5 + $0x190] sm:$0xf] %v1572
    %1701 = vst [vmem:[#allocation5 + $0x194] sm:$0xf] %v1573
    %1702 = vst [vmem:[#allocation5 + $0x198] sm:$0xf] %v1574
    %1703 = vst [vmem:[#allocation5 + $0x19c] sm:$0xf] %v1575
    %1704 = vst [vmem:[#allocation5 + $0x1a0] sm:$0xf] %v1576
    %1705 = vst [vmem:[#allocation5 + $0x1a4] sm:$0xf] %v1577
    %1706 = vst [vmem:[#allocation5 + $0x1a8] sm:$0xf] %v1578
    %1707 = vst [vmem:[#allocation5 + $0x1ac] sm:$0xf] %v1579
    %1708 = vst [vmem:[#allocation5 + $0x1b0] sm:$0xf] %v1580
    %1709 = vst [vmem:[#allocation5 + $0x1b4] sm:$0xf] %v1581
    %1710 = vst [vmem:[#allocation5 + $0x1b8] sm:$0xf] %v1582
    %1711 = vst [vmem:[#allocation5 + $0x1bc] sm:$0xf] %v1583
    %1712 = vst [vmem:[#allocation5 + $0x1c0] sm:$0xf] %v1584
    %1713 = vst [vmem:[#allocation5 + $0x1c4] sm:$0xf] %v1585
    %1714 = vst [vmem:[#allocation5 + $0x1c8] sm:$0xf] %v1586
    %1715 = vst [vmem:[#allocation5 + $0x1cc] sm:$0xf] %v1587
    %1716 = vst [vmem:[#allocation5 + $0x1d0] sm:$0xf] %v1588
    %1717 = vst [vmem:[#allocation5 + $0x1d4] sm:$0xf] %v1589
    %1718 = vst [vmem:[#allocation5 + $0x1d8] sm:$0xf] %v1590
    %1719 = vst [vmem:[#allocation5 + $0x1dc] sm:$0xf] %v1591
    %1720 = vst [vmem:[#allocation5 + $0x1e0] sm:$0xf] %v1592
    %1721 = vst [vmem:[#allocation5 + $0x1e4] sm:$0xf] %v1593
    %1722 = vst [vmem:[#allocation5 + $0x1e8] sm:$0xf] %v1594
    %1723 = vst [vmem:[#allocation5 + $0x1ec] sm:$0xf] %v1595
    %1724 = vst [vmem:[#allocation5 + $0x1f0] sm:$0xf] %v1596
    %1725 = vst [vmem:[#allocation5 + $0x1f4] sm:$0xf] %v1597
    %1726 = vst [vmem:[#allocation5 + $0x1f8] sm:$0xf] %v1598
    %1727 = vst [vmem:[#allocation5 + $0x1fc] sm:$0xf] %v1599
    // Predicated region
    $region18: #{tpu_custom_call.1} parent=1 // pred_check
      _
    $region19: #{tpu_custom_call.1} parent=1 // pred_check_branch
      %1729 = sbr.rel (0) target = $region21
    $region20: #{tpu_custom_call.1} parent=1 // pred_region
      %1731 = vsyncadd [#allocation4], 0
      %s1732 = sshll.u32 [#allocation5], 4
      %s1733 = int_to_ptr.vmem [resolvable:$true] %s1732
      %s1734 = sshll.u32 %s3, 4
      %s1735 = int_to_ptr.hbm [resolvable:$true] %s1734
      %1740 = dma.vmem_to_hbm [thread:$0]  %s1733, 8192, %s1735, [#allocation4], 64, 64, 4
    $region21: #{tpu_custom_call.1} parent=1 // pred_fallthru
      _
    // Predicated region
    $region22: #{tpu_custom_call.1} parent=1 // pred_check
      _
    $region23: #{tpu_custom_call.1} parent=1 // pred_check_branch
      %1742 = sbr.rel (0) target = $region25
    $region24: #{tpu_custom_call.1} parent=1 // pred_region
      %1744 = dma.done [#allocation4], 8192
    $region25: #{tpu_custom_call.1} parent=1 // pred_fallthru
      _
    %1745 = vsyncpa [#allocation3], 1
    %1746 = vsyncpa [#allocation4], 1

</llo_original>
